<compile_context>
chip_gen: v7x
topology: tpu7x:2x2x1
jax: 0.10.0
libtpu: 0.0.40
codegen_flags: <defaults>
</compile_context>

<pallas_src>
import functools

import jax
import jax.numpy as jnp
import numpy as np
from jax import lax
from jax.experimental import pallas as pl
from jax.experimental.pallas import tpu as pltpu


def _sa_kernel(w_ref, x_ref, colmask_ref, rowmask_ref, o_ref, *, C, H, W, K, P):
    # w_ref:       (2*K*K,)     SMEM (scalar prefetch) flattened conv weights
    # x_ref:       (TN, C, HW)  VMEM  lane-dense input block
    # colmask_ref: (K, HW)      VMEM  per-column-tap border masks
    # rowmask_ref: (K, HW)      VMEM  per-row-tap border masks
    # o_ref:       (TN, HW)     VMEM  sublane+lane dense output block
    HW = H * W

    # ---- Channel mean / running max, accumulated per channel in f32 --------
    # (avoids materializing a full-tile f32 copy of the block for bf16/int8
    # inputs; results are sublane- and lane-dense (TN, HW)).
    x0 = x_ref[:, 0, :].astype(jnp.float32)
    ssum = x0
    smax = x0
    for c in range(1, C):
        xc = x_ref[:, c, :].astype(jnp.float32)
        ssum = ssum + xc
        smax = jnp.maximum(smax, xc)
    avg = ssum * (1.0 / C)

    # Hoist all scalar weight reads (SMEM) out of the tap loops.
    # Conv input channel 0 = avg map, channel 1 = max map.
    w_avg = [[w_ref[ki * K + kj] for kj in range(K)] for ki in range(K)]
    w_max = [[w_ref[K * K + ki * K + kj] for kj in range(K)] for ki in range(K)]

    # Hoist the mask loads (each row is (HW,), broadcast over TN sublanes).
    colm = colmask_ref[...]            # (K, HW)
    rowm = rowmask_ref[...]            # (K, HW)

    # ---- Column pass: masked, column-shifted avg/max maps (reused per ki) --
    avg_cols = []
    max_cols = []
    for kj in range(K):
        dj = kj - P
        a, m = avg, smax
        if dj != 0:
            a = pltpu.roll(a, shift=(-dj) % HW, axis=1)
            m = pltpu.roll(m, shift=(-dj) % HW, axis=1)
        cmask = colm[kj]               # (HW,)
        avg_cols.append(cmask * a)     # (TN, HW)
        max_cols.append(cmask * m)

    # ---- Row pass: weight contraction + one row roll + row mask per ki -----
    acc = None
    for ki in range(K):
        inner = None
        for kj in range(K):
            t = w_avg[ki][kj] * avg_cols[kj] + w_max[ki][kj] * max_cols[kj]
            inner = t if inner is None else inner + t
        di = (ki - P) * W
        if di != 0:
            inner = pltpu.roll(inner, shift=(-di) % HW, axis=1)
        term = rowm[ki] * inner
        acc = term if acc is None else acc + term

    o_ref[...] = jax.nn.sigmoid(acc).astype(o_ref.dtype)


def _build_separable_masks(H, W, K):
    """Separable border-validity masks, each (K, H*W) f32 (zero padding)."""
    P = K // 2
    ii = np.repeat(np.arange(H), W)          # row index of each flat position
    jj = np.tile(np.arange(W), H)            # col index of each flat position
    col = np.zeros((K, H * W), np.float32)
    row = np.zeros((K, H * W), np.float32)
    for k in range(K):
        col[k] = ((jj + k - P >= 0) & (jj + k - P < W)).astype(np.float32)
        row[k] = ((ii + k - P >= 0) & (ii + k - P < H)).astype(np.float32)
    return jnp.asarray(col), jnp.asarray(row)


def _vmem_capacity_bytes():
    try:
        return int(pltpu.get_tpu_info().vmem_capacity_bytes)
    except Exception:
        return 64 * 2**20   # conservative fallback (v7x per-core VMEM)


def _pick_tn(n, bytes_per_image, budget_bytes):
    """Images per grid step: sublane-aligned (multiple of 8, or == N for tiny
    batches), as large as the VMEM budget allows, keeping >= 2 grid steps when
    that does not push TN below 8 (pipeline / megacore overlap)."""
    if n <= 8:
        return n                                   # block == full batch dim
    cap = max(1, int(budget_bytes // max(bytes_per_image, 1)))
    tn = min((cap // 8) * 8, ((n + 7) // 8) * 8)
    tn = max(tn, 8)
    if tn >= n and n >= 16:                        # keep >= 2 grid steps
        tn = max(8, (((n + 1) // 2) // 8) * 8)
    return tn


def spatial_attention(x, w):
    """x: (N, C, H, W); w: (1, 2, K, K) -> (N, 1, H, W) attention map."""
    N, C, H, W_ = x.shape
    K = w.shape[-1]
    P = K // 2
    HW = H * W_
    isz = jnp.dtype(x.dtype).itemsize

    # Per-image VMEM footprint: double-buffered input + output blocks plus the
    # f32 intermediates live across the tap loop (~20 HW-rows per image).
    bytes_per_image = 2 * C * HW * isz + 2 * HW * isz + 20 * HW * 4
    vmem_cap = _vmem_capacity_bytes()
    budget = max(vmem_cap // 8, 2 << 20)
    TN = _pick_tn(N, bytes_per_image, budget)

    n_blocks = -(-N // TN)                          # cdiv
    N_pad = n_blocks * TN

    x_flat = x.reshape(N, C, HW)                    # lane-dense minor axis
    if N_pad != N:                                  # awkward N: zero-pad batch
        x_flat = jnp.pad(x_flat, ((0, N_pad - N), (0, 0), (0, 0)))

    w_flat = w.reshape(-1).astype(jnp.float32)      # (2*K*K,) -> SMEM
    colmask, rowmask = _build_separable_masks(H, W_, K)   # (K, HW) each

    # Explicit scoped-VMEM limit from actual residency (+25% headroom).
    mask_bytes = 2 * 2 * K * HW * 4                 # two masks, double-buffered
    residency = TN * bytes_per_image + mask_bytes
    vmem_limit = int(min(int(0.9 * vmem_cap),
                         max(16 << 20, int(1.25 * residency))))

    kernel = functools.partial(_sa_kernel, C=C, H=H, W=W_, K=K, P=P)

    y = pl.pallas_call(
        kernel,
        out_shape=jax.ShapeDtypeStruct((N_pad, HW), x.dtype),
        grid_spec=pltpu.PrefetchScalarGridSpec(
            num_scalar_prefetch=1,
            grid=(n_blocks,),
            in_specs=[
                pl.BlockSpec((TN, C, HW), lambda n, w_s: (n, 0, 0)),
                pl.BlockSpec((K, HW), lambda n, w_s: (0, 0)),
                pl.BlockSpec((K, HW), lambda n, w_s: (0, 0)),
            ],
            out_specs=pl.BlockSpec((TN, HW), lambda n, w_s: (n, 0)),
        ),
        compiler_params=pltpu.CompilerParams(
            dimension_semantics=("parallel",),
            vmem_limit_bytes=vmem_limit),
    )(w_flat, x_flat, colmask, rowmask)

    return y[:N].reshape(N, 1, H, W_)


def _reference(x, w):
    # Pure-JAX reference for verification.
    avg = jnp.mean(x, axis=1, keepdims=True)
    mx = jnp.max(x, axis=1, keepdims=True)
    cat = jnp.concatenate([avg, mx], axis=1)        # (N, 2, H, W)
    K = w.shape[-1]
    y = lax.conv_general_dilated(
        cat, w, window_strides=(1, 1), padding=[(K // 2, K // 2)] * 2,
        dimension_numbers=("NCHW", "OIHW", "NCHW"))
    return jax.nn.sigmoid(y)


if __name__ == "__main__":
    key = jax.random.PRNGKey(0)
    kx, kw = jax.random.split(key)

    N, C, H, W = 2, 4, 16, 16
    K = 7
    x = jax.random.normal(kx, (N, C, H, W), dtype=jnp.float32)
    # Deterministic "kaiming-uniform-like" init for conv1: (out=1, in=2, 7, 7).
    fan_in = 2 * K * K
    bound = 1.0 / np.sqrt(fan_in)
    w = jax.random.uniform(kw, (1, 2, K, K), dtype=jnp.float32,
                           minval=-bound, maxval=bound)

    out = jax.block_until_ready(spatial_attention(x, w))
    ref = jax.block_until_ready(_reference(x, w))
    np.testing.assert_allclose(np.asarray(out), np.asarray(ref),
                               rtol=1e-4, atol=1e-5)
    print("KERNEL_OK")
</pallas_src>

<mosaic_0001>
module attributes {stable_mosaic.version = 11 : i64} {
  func.func @_sa_kernel(%arg0: i32, %arg1: memref<98xf32, #tpu.memory_space<smem>>, %arg2: memref<2x4x256xf32, #tpu.memory_space<vmem>>, %arg3: memref<7x256xf32, #tpu.memory_space<vmem>>, %arg4: memref<7x256xf32, #tpu.memory_space<vmem>>, %arg5: memref<2x256xf32, #tpu.memory_space<vmem>>) attributes {dimension_semantics = [#tpu.dimension_semantics<parallel>], iteration_bounds = array<i64: 1>, scalar_prefetch = 1 : i64, scratch_operands = 0 : i64, tpu.core_type = #tpu.core_type<tc>, window_params = [{transform_indices = @transform_0, window_bounds = array<i64: 2, 4, 256>}, {pipeline_mode = #tpu.pipeline_mode<synchronous>, transform_indices = @transform_1, window_bounds = array<i64: 7, 256>}, {pipeline_mode = #tpu.pipeline_mode<synchronous>, transform_indices = @transform_2, window_bounds = array<i64: 7, 256>}, {transform_indices = @transform_3, window_bounds = array<i64: 2, 256>}]} {
    %c0 = arith.constant 0 : index
    %c0_0 = arith.constant 0 : index
    %c0_1 = arith.constant 0 : index
    %0 = vector.load %arg2[%c0, %c0_0, %c0_1] : memref<2x4x256xf32, #tpu.memory_space<vmem>>, vector<2x1x256xf32>
    %1 = vector.shape_cast %0 : vector<2x1x256xf32> to vector<2x256xf32>
    %c0_2 = arith.constant 0 : index
    %c1 = arith.constant 1 : index
    %c0_3 = arith.constant 0 : index
    %2 = vector.load %arg2[%c0_2, %c1, %c0_3] : memref<2x4x256xf32, #tpu.memory_space<vmem>>, vector<2x1x256xf32>
    %3 = vector.shape_cast %2 : vector<2x1x256xf32> to vector<2x256xf32>
    %4 = arith.addf %1, %3 : vector<2x256xf32>
    %5 = arith.maximumf %1, %3 : vector<2x256xf32>
    %c0_4 = arith.constant 0 : index
    %c2 = arith.constant 2 : index
    %c0_5 = arith.constant 0 : index
    %6 = vector.load %arg2[%c0_4, %c2, %c0_5] : memref<2x4x256xf32, #tpu.memory_space<vmem>>, vector<2x1x256xf32>
    %7 = vector.shape_cast %6 : vector<2x1x256xf32> to vector<2x256xf32>
    %8 = arith.addf %4, %7 : vector<2x256xf32>
    %9 = arith.maximumf %5, %7 : vector<2x256xf32>
    %c0_6 = arith.constant 0 : index
    %c3 = arith.constant 3 : index
    %c0_7 = arith.constant 0 : index
    %10 = vector.load %arg2[%c0_6, %c3, %c0_7] : memref<2x4x256xf32, #tpu.memory_space<vmem>>, vector<2x1x256xf32>
    %11 = vector.shape_cast %10 : vector<2x1x256xf32> to vector<2x256xf32>
    %12 = arith.addf %8, %11 : vector<2x256xf32>
    %13 = arith.maximumf %9, %11 : vector<2x256xf32>
    %cst = arith.constant 2.500000e-01 : f32
    %14 = vector.broadcast %cst : f32 to vector<2x256xf32>
    %15 = arith.mulf %12, %14 : vector<2x256xf32>
    %c0_8 = arith.constant 0 : index
    %16 = memref.load %arg1[%c0_8] : memref<98xf32, #tpu.memory_space<smem>>
    %c1_9 = arith.constant 1 : index
    %17 = memref.load %arg1[%c1_9] : memref<98xf32, #tpu.memory_space<smem>>
    %c2_10 = arith.constant 2 : index
    %18 = memref.load %arg1[%c2_10] : memref<98xf32, #tpu.memory_space<smem>>
    %c3_11 = arith.constant 3 : index
    %19 = memref.load %arg1[%c3_11] : memref<98xf32, #tpu.memory_space<smem>>
    %c4 = arith.constant 4 : index
    %20 = memref.load %arg1[%c4] : memref<98xf32, #tpu.memory_space<smem>>
    %c5 = arith.constant 5 : index
    %21 = memref.load %arg1[%c5] : memref<98xf32, #tpu.memory_space<smem>>
    %c6 = arith.constant 6 : index
    %22 = memref.load %arg1[%c6] : memref<98xf32, #tpu.memory_space<smem>>
    %c7 = arith.constant 7 : index
    %23 = memref.load %arg1[%c7] : memref<98xf32, #tpu.memory_space<smem>>
    %c8 = arith.constant 8 : index
    %24 = memref.load %arg1[%c8] : memref<98xf32, #tpu.memory_space<smem>>
    %c9 = arith.constant 9 : index
    %25 = memref.load %arg1[%c9] : memref<98xf32, #tpu.memory_space<smem>>
    %c10 = arith.constant 10 : index
    %26 = memref.load %arg1[%c10] : memref<98xf32, #tpu.memory_space<smem>>
    %c11 = arith.constant 11 : index
    %27 = memref.load %arg1[%c11] : memref<98xf32, #tpu.memory_space<smem>>
    %c12 = arith.constant 12 : index
    %28 = memref.load %arg1[%c12] : memref<98xf32, #tpu.memory_space<smem>>
    %c13 = arith.constant 13 : index
    %29 = memref.load %arg1[%c13] : memref<98xf32, #tpu.memory_space<smem>>
    %c14 = arith.constant 14 : index
    %30 = memref.load %arg1[%c14] : memref<98xf32, #tpu.memory_space<smem>>
    %c15 = arith.constant 15 : index
    %31 = memref.load %arg1[%c15] : memref<98xf32, #tpu.memory_space<smem>>
    %c16 = arith.constant 16 : index
    %32 = memref.load %arg1[%c16] : memref<98xf32, #tpu.memory_space<smem>>
    %c17 = arith.constant 17 : index
    %33 = memref.load %arg1[%c17] : memref<98xf32, #tpu.memory_space<smem>>
    %c18 = arith.constant 18 : index
    %34 = memref.load %arg1[%c18] : memref<98xf32, #tpu.memory_space<smem>>
    %c19 = arith.constant 19 : index
    %35 = memref.load %arg1[%c19] : memref<98xf32, #tpu.memory_space<smem>>
    %c20 = arith.constant 20 : index
    %36 = memref.load %arg1[%c20] : memref<98xf32, #tpu.memory_space<smem>>
    %c21 = arith.constant 21 : index
    %37 = memref.load %arg1[%c21] : memref<98xf32, #tpu.memory_space<smem>>
    %c22 = arith.constant 22 : index
    %38 = memref.load %arg1[%c22] : memref<98xf32, #tpu.memory_space<smem>>
    %c23 = arith.constant 23 : index
    %39 = memref.load %arg1[%c23] : memref<98xf32, #tpu.memory_space<smem>>
    %c24 = arith.constant 24 : index
    %40 = memref.load %arg1[%c24] : memref<98xf32, #tpu.memory_space<smem>>
    %c25 = arith.constant 25 : index
    %41 = memref.load %arg1[%c25] : memref<98xf32, #tpu.memory_space<smem>>
    %c26 = arith.constant 26 : index
    %42 = memref.load %arg1[%c26] : memref<98xf32, #tpu.memory_space<smem>>
    %c27 = arith.constant 27 : index
    %43 = memref.load %arg1[%c27] : memref<98xf32, #tpu.memory_space<smem>>
    %c28 = arith.constant 28 : index
    %44 = memref.load %arg1[%c28] : memref<98xf32, #tpu.memory_space<smem>>
    %c29 = arith.constant 29 : index
    %45 = memref.load %arg1[%c29] : memref<98xf32, #tpu.memory_space<smem>>
    %c30 = arith.constant 30 : index
    %46 = memref.load %arg1[%c30] : memref<98xf32, #tpu.memory_space<smem>>
    %c31 = arith.constant 31 : index
    %47 = memref.load %arg1[%c31] : memref<98xf32, #tpu.memory_space<smem>>
    %c32 = arith.constant 32 : index
    %48 = memref.load %arg1[%c32] : memref<98xf32, #tpu.memory_space<smem>>
    %c33 = arith.constant 33 : index
    %49 = memref.load %arg1[%c33] : memref<98xf32, #tpu.memory_space<smem>>
    %c34 = arith.constant 34 : index
    %50 = memref.load %arg1[%c34] : memref<98xf32, #tpu.memory_space<smem>>
    %c35 = arith.constant 35 : index
    %51 = memref.load %arg1[%c35] : memref<98xf32, #tpu.memory_space<smem>>
    %c36 = arith.constant 36 : index
    %52 = memref.load %arg1[%c36] : memref<98xf32, #tpu.memory_space<smem>>
    %c37 = arith.constant 37 : index
    %53 = memref.load %arg1[%c37] : memref<98xf32, #tpu.memory_space<smem>>
    %c38 = arith.constant 38 : index
    %54 = memref.load %arg1[%c38] : memref<98xf32, #tpu.memory_space<smem>>
    %c39 = arith.constant 39 : index
    %55 = memref.load %arg1[%c39] : memref<98xf32, #tpu.memory_space<smem>>
    %c40 = arith.constant 40 : index
    %56 = memref.load %arg1[%c40] : memref<98xf32, #tpu.memory_space<smem>>
    %c41 = arith.constant 41 : index
    %57 = memref.load %arg1[%c41] : memref<98xf32, #tpu.memory_space<smem>>
    %c42 = arith.constant 42 : index
    %58 = memref.load %arg1[%c42] : memref<98xf32, #tpu.memory_space<smem>>
    %c43 = arith.constant 43 : index
    %59 = memref.load %arg1[%c43] : memref<98xf32, #tpu.memory_space<smem>>
    %c44 = arith.constant 44 : index
    %60 = memref.load %arg1[%c44] : memref<98xf32, #tpu.memory_space<smem>>
    %c45 = arith.constant 45 : index
    %61 = memref.load %arg1[%c45] : memref<98xf32, #tpu.memory_space<smem>>
    %c46 = arith.constant 46 : index
    %62 = memref.load %arg1[%c46] : memref<98xf32, #tpu.memory_space<smem>>
    %c47 = arith.constant 47 : index
    %63 = memref.load %arg1[%c47] : memref<98xf32, #tpu.memory_space<smem>>
    %c48 = arith.constant 48 : index
    %64 = memref.load %arg1[%c48] : memref<98xf32, #tpu.memory_space<smem>>
    %c49 = arith.constant 49 : index
    %65 = memref.load %arg1[%c49] : memref<98xf32, #tpu.memory_space<smem>>
    %c50 = arith.constant 50 : index
    %66 = memref.load %arg1[%c50] : memref<98xf32, #tpu.memory_space<smem>>
    %c51 = arith.constant 51 : index
    %67 = memref.load %arg1[%c51] : memref<98xf32, #tpu.memory_space<smem>>
    %c52 = arith.constant 52 : index
    %68 = memref.load %arg1[%c52] : memref<98xf32, #tpu.memory_space<smem>>
    %c53 = arith.constant 53 : index
    %69 = memref.load %arg1[%c53] : memref<98xf32, #tpu.memory_space<smem>>
    %c54 = arith.constant 54 : index
    %70 = memref.load %arg1[%c54] : memref<98xf32, #tpu.memory_space<smem>>
    %c55 = arith.constant 55 : index
    %71 = memref.load %arg1[%c55] : memref<98xf32, #tpu.memory_space<smem>>
    %c56 = arith.constant 56 : index
    %72 = memref.load %arg1[%c56] : memref<98xf32, #tpu.memory_space<smem>>
    %c57 = arith.constant 57 : index
    %73 = memref.load %arg1[%c57] : memref<98xf32, #tpu.memory_space<smem>>
    %c58 = arith.constant 58 : index
    %74 = memref.load %arg1[%c58] : memref<98xf32, #tpu.memory_space<smem>>
    %c59 = arith.constant 59 : index
    %75 = memref.load %arg1[%c59] : memref<98xf32, #tpu.memory_space<smem>>
    %c60 = arith.constant 60 : index
    %76 = memref.load %arg1[%c60] : memref<98xf32, #tpu.memory_space<smem>>
    %c61 = arith.constant 61 : index
    %77 = memref.load %arg1[%c61] : memref<98xf32, #tpu.memory_space<smem>>
    %c62 = arith.constant 62 : index
    %78 = memref.load %arg1[%c62] : memref<98xf32, #tpu.memory_space<smem>>
    %c63 = arith.constant 63 : index
    %79 = memref.load %arg1[%c63] : memref<98xf32, #tpu.memory_space<smem>>
    %c64 = arith.constant 64 : index
    %80 = memref.load %arg1[%c64] : memref<98xf32, #tpu.memory_space<smem>>
    %c65 = arith.constant 65 : index
    %81 = memref.load %arg1[%c65] : memref<98xf32, #tpu.memory_space<smem>>
    %c66 = arith.constant 66 : index
    %82 = memref.load %arg1[%c66] : memref<98xf32, #tpu.memory_space<smem>>
    %c67 = arith.constant 67 : index
    %83 = memref.load %arg1[%c67] : memref<98xf32, #tpu.memory_space<smem>>
    %c68 = arith.constant 68 : index
    %84 = memref.load %arg1[%c68] : memref<98xf32, #tpu.memory_space<smem>>
    %c69 = arith.constant 69 : index
    %85 = memref.load %arg1[%c69] : memref<98xf32, #tpu.memory_space<smem>>
    %c70 = arith.constant 70 : index
    %86 = memref.load %arg1[%c70] : memref<98xf32, #tpu.memory_space<smem>>
    %c71 = arith.constant 71 : index
    %87 = memref.load %arg1[%c71] : memref<98xf32, #tpu.memory_space<smem>>
    %c72 = arith.constant 72 : index
    %88 = memref.load %arg1[%c72] : memref<98xf32, #tpu.memory_space<smem>>
    %c73 = arith.constant 73 : index
    %89 = memref.load %arg1[%c73] : memref<98xf32, #tpu.memory_space<smem>>
    %c74 = arith.constant 74 : index
    %90 = memref.load %arg1[%c74] : memref<98xf32, #tpu.memory_space<smem>>
    %c75 = arith.constant 75 : index
    %91 = memref.load %arg1[%c75] : memref<98xf32, #tpu.memory_space<smem>>
    %c76 = arith.constant 76 : index
    %92 = memref.load %arg1[%c76] : memref<98xf32, #tpu.memory_space<smem>>
    %c77 = arith.constant 77 : index
    %93 = memref.load %arg1[%c77] : memref<98xf32, #tpu.memory_space<smem>>
    %c78 = arith.constant 78 : index
    %94 = memref.load %arg1[%c78] : memref<98xf32, #tpu.memory_space<smem>>
    %c79 = arith.constant 79 : index
    %95 = memref.load %arg1[%c79] : memref<98xf32, #tpu.memory_space<smem>>
    %c80 = arith.constant 80 : index
    %96 = memref.load %arg1[%c80] : memref<98xf32, #tpu.memory_space<smem>>
    %c81 = arith.constant 81 : index
    %97 = memref.load %arg1[%c81] : memref<98xf32, #tpu.memory_space<smem>>
    %c82 = arith.constant 82 : index
    %98 = memref.load %arg1[%c82] : memref<98xf32, #tpu.memory_space<smem>>
    %c83 = arith.constant 83 : index
    %99 = memref.load %arg1[%c83] : memref<98xf32, #tpu.memory_space<smem>>
    %c84 = arith.constant 84 : index
    %100 = memref.load %arg1[%c84] : memref<98xf32, #tpu.memory_space<smem>>
    %c85 = arith.constant 85 : index
    %101 = memref.load %arg1[%c85] : memref<98xf32, #tpu.memory_space<smem>>
    %c86 = arith.constant 86 : index
    %102 = memref.load %arg1[%c86] : memref<98xf32, #tpu.memory_space<smem>>
    %c87 = arith.constant 87 : index
    %103 = memref.load %arg1[%c87] : memref<98xf32, #tpu.memory_space<smem>>
    %c88 = arith.constant 88 : index
    %104 = memref.load %arg1[%c88] : memref<98xf32, #tpu.memory_space<smem>>
    %c89 = arith.constant 89 : index
    %105 = memref.load %arg1[%c89] : memref<98xf32, #tpu.memory_space<smem>>
    %c90 = arith.constant 90 : index
    %106 = memref.load %arg1[%c90] : memref<98xf32, #tpu.memory_space<smem>>
    %c91 = arith.constant 91 : index
    %107 = memref.load %arg1[%c91] : memref<98xf32, #tpu.memory_space<smem>>
    %c92 = arith.constant 92 : index
    %108 = memref.load %arg1[%c92] : memref<98xf32, #tpu.memory_space<smem>>
    %c93 = arith.constant 93 : index
    %109 = memref.load %arg1[%c93] : memref<98xf32, #tpu.memory_space<smem>>
    %c94 = arith.constant 94 : index
    %110 = memref.load %arg1[%c94] : memref<98xf32, #tpu.memory_space<smem>>
    %c95 = arith.constant 95 : index
    %111 = memref.load %arg1[%c95] : memref<98xf32, #tpu.memory_space<smem>>
    %c96 = arith.constant 96 : index
    %112 = memref.load %arg1[%c96] : memref<98xf32, #tpu.memory_space<smem>>
    %c97 = arith.constant 97 : index
    %113 = memref.load %arg1[%c97] : memref<98xf32, #tpu.memory_space<smem>>
    %c0_12 = arith.constant 0 : index
    %c0_13 = arith.constant 0 : index
    %114 = vector.load %arg3[%c0_12, %c0_13] : memref<7x256xf32, #tpu.memory_space<vmem>>, vector<7x256xf32>
    %c0_14 = arith.constant 0 : index
    %c0_15 = arith.constant 0 : index
    %115 = vector.load %arg4[%c0_14, %c0_15] : memref<7x256xf32, #tpu.memory_space<vmem>>, vector<7x256xf32>
    %c3_i32 = arith.constant 3 : i32
    %116 = tpu.dynamic_rotate %15 by %c3_i32 dim 1 : vector<2x256xf32>, i32 -> vector<2x256xf32>
    %c3_i32_16 = arith.constant 3 : i32
    %117 = tpu.dynamic_rotate %13 by %c3_i32_16 dim 1 : vector<2x256xf32>, i32 -> vector<2x256xf32>
    %118 = vector.extract_strided_slice %114 {offsets = [0, 0], sizes = [1, 256], strides = [1, 1]} : vector<7x256xf32> to vector<1x256xf32>
    %119 = vector.shape_cast %118 : vector<1x256xf32> to vector<256xf32>
    %120 = vector.shape_cast %119 : vector<256xf32> to vector<1x256xf32>
    %121 = vector.broadcast %120 : vector<1x256xf32> to vector<2x256xf32>
    %122 = arith.mulf %121, %116 : vector<2x256xf32>
    %123 = vector.shape_cast %119 : vector<256xf32> to vector<1x256xf32>
    %124 = vector.broadcast %123 : vector<1x256xf32> to vector<2x256xf32>
    %125 = arith.mulf %124, %117 : vector<2x256xf32>
    %c2_i32 = arith.constant 2 : i32
    %126 = tpu.dynamic_rotate %15 by %c2_i32 dim 1 : vector<2x256xf32>, i32 -> vector<2x256xf32>
    %c2_i32_17 = arith.constant 2 : i32
    %127 = tpu.dynamic_rotate %13 by %c2_i32_17 dim 1 : vector<2x256xf32>, i32 -> vector<2x256xf32>
    %128 = vector.extract_strided_slice %114 {offsets = [1, 0], sizes = [1, 256], strides = [1, 1]} : vector<7x256xf32> to vector<1x256xf32>
    %129 = vector.shape_cast %128 : vector<1x256xf32> to vector<256xf32>
    %130 = vector.shape_cast %129 : vector<256xf32> to vector<1x256xf32>
    %131 = vector.broadcast %130 : vector<1x256xf32> to vector<2x256xf32>
    %132 = arith.mulf %131, %126 : vector<2x256xf32>
    %133 = vector.shape_cast %129 : vector<256xf32> to vector<1x256xf32>
    %134 = vector.broadcast %133 : vector<1x256xf32> to vector<2x256xf32>
    %135 = arith.mulf %134, %127 : vector<2x256xf32>
    %c1_i32 = arith.constant 1 : i32
    %136 = tpu.dynamic_rotate %15 by %c1_i32 dim 1 : vector<2x256xf32>, i32 -> vector<2x256xf32>
    %c1_i32_18 = arith.constant 1 : i32
    %137 = tpu.dynamic_rotate %13 by %c1_i32_18 dim 1 : vector<2x256xf32>, i32 -> vector<2x256xf32>
    %138 = vector.extract_strided_slice %114 {offsets = [2, 0], sizes = [1, 256], strides = [1, 1]} : vector<7x256xf32> to vector<1x256xf32>
    %139 = vector.shape_cast %138 : vector<1x256xf32> to vector<256xf32>
    %140 = vector.shape_cast %139 : vector<256xf32> to vector<1x256xf32>
    %141 = vector.broadcast %140 : vector<1x256xf32> to vector<2x256xf32>
    %142 = arith.mulf %141, %136 : vector<2x256xf32>
    %143 = vector.shape_cast %139 : vector<256xf32> to vector<1x256xf32>
    %144 = vector.broadcast %143 : vector<1x256xf32> to vector<2x256xf32>
    %145 = arith.mulf %144, %137 : vector<2x256xf32>
    %146 = vector.extract_strided_slice %114 {offsets = [3, 0], sizes = [1, 256], strides = [1, 1]} : vector<7x256xf32> to vector<1x256xf32>
    %147 = vector.shape_cast %146 : vector<1x256xf32> to vector<256xf32>
    %148 = vector.shape_cast %147 : vector<256xf32> to vector<1x256xf32>
    %149 = vector.broadcast %148 : vector<1x256xf32> to vector<2x256xf32>
    %150 = arith.mulf %149, %15 : vector<2x256xf32>
    %151 = vector.shape_cast %147 : vector<256xf32> to vector<1x256xf32>
    %152 = vector.broadcast %151 : vector<1x256xf32> to vector<2x256xf32>
    %153 = arith.mulf %152, %13 : vector<2x256xf32>
    %c255_i32 = arith.constant 255 : i32
    %154 = tpu.dynamic_rotate %15 by %c255_i32 dim 1 : vector<2x256xf32>, i32 -> vector<2x256xf32>
    %c255_i32_19 = arith.constant 255 : i32
    %155 = tpu.dynamic_rotate %13 by %c255_i32_19 dim 1 : vector<2x256xf32>, i32 -> vector<2x256xf32>
    %156 = vector.extract_strided_slice %114 {offsets = [4, 0], sizes = [1, 256], strides = [1, 1]} : vector<7x256xf32> to vector<1x256xf32>
    %157 = vector.shape_cast %156 : vector<1x256xf32> to vector<256xf32>
    %158 = vector.shape_cast %157 : vector<256xf32> to vector<1x256xf32>
    %159 = vector.broadcast %158 : vector<1x256xf32> to vector<2x256xf32>
    %160 = arith.mulf %159, %154 : vector<2x256xf32>
    %161 = vector.shape_cast %157 : vector<256xf32> to vector<1x256xf32>
    %162 = vector.broadcast %161 : vector<1x256xf32> to vector<2x256xf32>
    %163 = arith.mulf %162, %155 : vector<2x256xf32>
    %c254_i32 = arith.constant 254 : i32
    %164 = tpu.dynamic_rotate %15 by %c254_i32 dim 1 : vector<2x256xf32>, i32 -> vector<2x256xf32>
    %c254_i32_20 = arith.constant 254 : i32
    %165 = tpu.dynamic_rotate %13 by %c254_i32_20 dim 1 : vector<2x256xf32>, i32 -> vector<2x256xf32>
    %166 = vector.extract_strided_slice %114 {offsets = [5, 0], sizes = [1, 256], strides = [1, 1]} : vector<7x256xf32> to vector<1x256xf32>
    %167 = vector.shape_cast %166 : vector<1x256xf32> to vector<256xf32>
    %168 = vector.shape_cast %167 : vector<256xf32> to vector<1x256xf32>
    %169 = vector.broadcast %168 : vector<1x256xf32> to vector<2x256xf32>
    %170 = arith.mulf %169, %164 : vector<2x256xf32>
    %171 = vector.shape_cast %167 : vector<256xf32> to vector<1x256xf32>
    %172 = vector.broadcast %171 : vector<1x256xf32> to vector<2x256xf32>
    %173 = arith.mulf %172, %165 : vector<2x256xf32>
    %c253_i32 = arith.constant 253 : i32
    %174 = tpu.dynamic_rotate %15 by %c253_i32 dim 1 : vector<2x256xf32>, i32 -> vector<2x256xf32>
    %c253_i32_21 = arith.constant 253 : i32
    %175 = tpu.dynamic_rotate %13 by %c253_i32_21 dim 1 : vector<2x256xf32>, i32 -> vector<2x256xf32>
    %176 = vector.extract_strided_slice %114 {offsets = [6, 0], sizes = [1, 256], strides = [1, 1]} : vector<7x256xf32> to vector<1x256xf32>
    %177 = vector.shape_cast %176 : vector<1x256xf32> to vector<256xf32>
    %178 = vector.shape_cast %177 : vector<256xf32> to vector<1x256xf32>
    %179 = vector.broadcast %178 : vector<1x256xf32> to vector<2x256xf32>
    %180 = arith.mulf %179, %174 : vector<2x256xf32>
    %181 = vector.shape_cast %177 : vector<256xf32> to vector<1x256xf32>
    %182 = vector.broadcast %181 : vector<1x256xf32> to vector<2x256xf32>
    %183 = arith.mulf %182, %175 : vector<2x256xf32>
    %184 = vector.broadcast %16 : f32 to vector<2x256xf32>
    %185 = arith.mulf %184, %122 : vector<2x256xf32>
    %186 = vector.broadcast %65 : f32 to vector<2x256xf32>
    %187 = arith.mulf %186, %125 : vector<2x256xf32>
    %188 = arith.addf %185, %187 : vector<2x256xf32>
    %189 = vector.broadcast %17 : f32 to vector<2x256xf32>
    %190 = arith.mulf %189, %132 : vector<2x256xf32>
    %191 = vector.broadcast %66 : f32 to vector<2x256xf32>
    %192 = arith.mulf %191, %135 : vector<2x256xf32>
    %193 = arith.addf %190, %192 : vector<2x256xf32>
    %194 = arith.addf %188, %193 : vector<2x256xf32>
    %195 = vector.broadcast %18 : f32 to vector<2x256xf32>
    %196 = arith.mulf %195, %142 : vector<2x256xf32>
    %197 = vector.broadcast %67 : f32 to vector<2x256xf32>
    %198 = arith.mulf %197, %145 : vector<2x256xf32>
    %199 = arith.addf %196, %198 : vector<2x256xf32>
    %200 = arith.addf %194, %199 : vector<2x256xf32>
    %201 = vector.broadcast %19 : f32 to vector<2x256xf32>
    %202 = arith.mulf %201, %150 : vector<2x256xf32>
    %203 = vector.broadcast %68 : f32 to vector<2x256xf32>
    %204 = arith.mulf %203, %153 : vector<2x256xf32>
    %205 = arith.addf %202, %204 : vector<2x256xf32>
    %206 = arith.addf %200, %205 : vector<2x256xf32>
    %207 = vector.broadcast %20 : f32 to vector<2x256xf32>
    %208 = arith.mulf %207, %160 : vector<2x256xf32>
    %209 = vector.broadcast %69 : f32 to vector<2x256xf32>
    %210 = arith.mulf %209, %163 : vector<2x256xf32>
    %211 = arith.addf %208, %210 : vector<2x256xf32>
    %212 = arith.addf %206, %211 : vector<2x256xf32>
    %213 = vector.broadcast %21 : f32 to vector<2x256xf32>
    %214 = arith.mulf %213, %170 : vector<2x256xf32>
    %215 = vector.broadcast %70 : f32 to vector<2x256xf32>
    %216 = arith.mulf %215, %173 : vector<2x256xf32>
    %217 = arith.addf %214, %216 : vector<2x256xf32>
    %218 = arith.addf %212, %217 : vector<2x256xf32>
    %219 = vector.broadcast %22 : f32 to vector<2x256xf32>
    %220 = arith.mulf %219, %180 : vector<2x256xf32>
    %221 = vector.broadcast %71 : f32 to vector<2x256xf32>
    %222 = arith.mulf %221, %183 : vector<2x256xf32>
    %223 = arith.addf %220, %222 : vector<2x256xf32>
    %224 = arith.addf %218, %223 : vector<2x256xf32>
    %c48_i32 = arith.constant 48 : i32
    %225 = tpu.dynamic_rotate %224 by %c48_i32 dim 1 : vector<2x256xf32>, i32 -> vector<2x256xf32>
    %226 = vector.extract_strided_slice %115 {offsets = [0, 0], sizes = [1, 256], strides = [1, 1]} : vector<7x256xf32> to vector<1x256xf32>
    %227 = vector.shape_cast %226 : vector<1x256xf32> to vector<256xf32>
    %228 = vector.shape_cast %227 : vector<256xf32> to vector<1x256xf32>
    %229 = vector.broadcast %228 : vector<1x256xf32> to vector<2x256xf32>
    %230 = arith.mulf %229, %225 : vector<2x256xf32>
    %231 = vector.broadcast %23 : f32 to vector<2x256xf32>
    %232 = arith.mulf %231, %122 : vector<2x256xf32>
    %233 = vector.broadcast %72 : f32 to vector<2x256xf32>
    %234 = arith.mulf %233, %125 : vector<2x256xf32>
    %235 = arith.addf %232, %234 : vector<2x256xf32>
    %236 = vector.broadcast %24 : f32 to vector<2x256xf32>
    %237 = arith.mulf %236, %132 : vector<2x256xf32>
    %238 = vector.broadcast %73 : f32 to vector<2x256xf32>
    %239 = arith.mulf %238, %135 : vector<2x256xf32>
    %240 = arith.addf %237, %239 : vector<2x256xf32>
    %241 = arith.addf %235, %240 : vector<2x256xf32>
    %242 = vector.broadcast %25 : f32 to vector<2x256xf32>
    %243 = arith.mulf %242, %142 : vector<2x256xf32>
    %244 = vector.broadcast %74 : f32 to vector<2x256xf32>
    %245 = arith.mulf %244, %145 : vector<2x256xf32>
    %246 = arith.addf %243, %245 : vector<2x256xf32>
    %247 = arith.addf %241, %246 : vector<2x256xf32>
    %248 = vector.broadcast %26 : f32 to vector<2x256xf32>
    %249 = arith.mulf %248, %150 : vector<2x256xf32>
    %250 = vector.broadcast %75 : f32 to vector<2x256xf32>
    %251 = arith.mulf %250, %153 : vector<2x256xf32>
    %252 = arith.addf %249, %251 : vector<2x256xf32>
    %253 = arith.addf %247, %252 : vector<2x256xf32>
    %254 = vector.broadcast %27 : f32 to vector<2x256xf32>
    %255 = arith.mulf %254, %160 : vector<2x256xf32>
    %256 = vector.broadcast %76 : f32 to vector<2x256xf32>
    %257 = arith.mulf %256, %163 : vector<2x256xf32>
    %258 = arith.addf %255, %257 : vector<2x256xf32>
    %259 = arith.addf %253, %258 : vector<2x256xf32>
    %260 = vector.broadcast %28 : f32 to vector<2x256xf32>
    %261 = arith.mulf %260, %170 : vector<2x256xf32>
    %262 = vector.broadcast %77 : f32 to vector<2x256xf32>
    %263 = arith.mulf %262, %173 : vector<2x256xf32>
    %264 = arith.addf %261, %263 : vector<2x256xf32>
    %265 = arith.addf %259, %264 : vector<2x256xf32>
    %266 = vector.broadcast %29 : f32 to vector<2x256xf32>
    %267 = arith.mulf %266, %180 : vector<2x256xf32>
    %268 = vector.broadcast %78 : f32 to vector<2x256xf32>
    %269 = arith.mulf %268, %183 : vector<2x256xf32>
    %270 = arith.addf %267, %269 : vector<2x256xf32>
    %271 = arith.addf %265, %270 : vector<2x256xf32>
    %c32_i32 = arith.constant 32 : i32
    %272 = tpu.dynamic_rotate %271 by %c32_i32 dim 1 : vector<2x256xf32>, i32 -> vector<2x256xf32>
    %273 = vector.extract_strided_slice %115 {offsets = [1, 0], sizes = [1, 256], strides = [1, 1]} : vector<7x256xf32> to vector<1x256xf32>
    %274 = vector.shape_cast %273 : vector<1x256xf32> to vector<256xf32>
    %275 = vector.shape_cast %274 : vector<256xf32> to vector<1x256xf32>
    %276 = vector.broadcast %275 : vector<1x256xf32> to vector<2x256xf32>
    %277 = arith.mulf %276, %272 : vector<2x256xf32>
    %278 = arith.addf %230, %277 : vector<2x256xf32>
    %279 = vector.broadcast %30 : f32 to vector<2x256xf32>
    %280 = arith.mulf %279, %122 : vector<2x256xf32>
    %281 = vector.broadcast %79 : f32 to vector<2x256xf32>
    %282 = arith.mulf %281, %125 : vector<2x256xf32>
    %283 = arith.addf %280, %282 : vector<2x256xf32>
    %284 = vector.broadcast %31 : f32 to vector<2x256xf32>
    %285 = arith.mulf %284, %132 : vector<2x256xf32>
    %286 = vector.broadcast %80 : f32 to vector<2x256xf32>
    %287 = arith.mulf %286, %135 : vector<2x256xf32>
    %288 = arith.addf %285, %287 : vector<2x256xf32>
    %289 = arith.addf %283, %288 : vector<2x256xf32>
    %290 = vector.broadcast %32 : f32 to vector<2x256xf32>
    %291 = arith.mulf %290, %142 : vector<2x256xf32>
    %292 = vector.broadcast %81 : f32 to vector<2x256xf32>
    %293 = arith.mulf %292, %145 : vector<2x256xf32>
    %294 = arith.addf %291, %293 : vector<2x256xf32>
    %295 = arith.addf %289, %294 : vector<2x256xf32>
    %296 = vector.broadcast %33 : f32 to vector<2x256xf32>
    %297 = arith.mulf %296, %150 : vector<2x256xf32>
    %298 = vector.broadcast %82 : f32 to vector<2x256xf32>
    %299 = arith.mulf %298, %153 : vector<2x256xf32>
    %300 = arith.addf %297, %299 : vector<2x256xf32>
    %301 = arith.addf %295, %300 : vector<2x256xf32>
    %302 = vector.broadcast %34 : f32 to vector<2x256xf32>
    %303 = arith.mulf %302, %160 : vector<2x256xf32>
    %304 = vector.broadcast %83 : f32 to vector<2x256xf32>
    %305 = arith.mulf %304, %163 : vector<2x256xf32>
    %306 = arith.addf %303, %305 : vector<2x256xf32>
    %307 = arith.addf %301, %306 : vector<2x256xf32>
    %308 = vector.broadcast %35 : f32 to vector<2x256xf32>
    %309 = arith.mulf %308, %170 : vector<2x256xf32>
    %310 = vector.broadcast %84 : f32 to vector<2x256xf32>
    %311 = arith.mulf %310, %173 : vector<2x256xf32>
    %312 = arith.addf %309, %311 : vector<2x256xf32>
    %313 = arith.addf %307, %312 : vector<2x256xf32>
    %314 = vector.broadcast %36 : f32 to vector<2x256xf32>
    %315 = arith.mulf %314, %180 : vector<2x256xf32>
    %316 = vector.broadcast %85 : f32 to vector<2x256xf32>
    %317 = arith.mulf %316, %183 : vector<2x256xf32>
    %318 = arith.addf %315, %317 : vector<2x256xf32>
    %319 = arith.addf %313, %318 : vector<2x256xf32>
    %c16_i32 = arith.constant 16 : i32
    %320 = tpu.dynamic_rotate %319 by %c16_i32 dim 1 : vector<2x256xf32>, i32 -> vector<2x256xf32>
    %321 = vector.extract_strided_slice %115 {offsets = [2, 0], sizes = [1, 256], strides = [1, 1]} : vector<7x256xf32> to vector<1x256xf32>
    %322 = vector.shape_cast %321 : vector<1x256xf32> to vector<256xf32>
    %323 = vector.shape_cast %322 : vector<256xf32> to vector<1x256xf32>
    %324 = vector.broadcast %323 : vector<1x256xf32> to vector<2x256xf32>
    %325 = arith.mulf %324, %320 : vector<2x256xf32>
    %326 = arith.addf %278, %325 : vector<2x256xf32>
    %327 = vector.broadcast %37 : f32 to vector<2x256xf32>
    %328 = arith.mulf %327, %122 : vector<2x256xf32>
    %329 = vector.broadcast %86 : f32 to vector<2x256xf32>
    %330 = arith.mulf %329, %125 : vector<2x256xf32>
    %331 = arith.addf %328, %330 : vector<2x256xf32>
    %332 = vector.broadcast %38 : f32 to vector<2x256xf32>
    %333 = arith.mulf %332, %132 : vector<2x256xf32>
    %334 = vector.broadcast %87 : f32 to vector<2x256xf32>
    %335 = arith.mulf %334, %135 : vector<2x256xf32>
    %336 = arith.addf %333, %335 : vector<2x256xf32>
    %337 = arith.addf %331, %336 : vector<2x256xf32>
    %338 = vector.broadcast %39 : f32 to vector<2x256xf32>
    %339 = arith.mulf %338, %142 : vector<2x256xf32>
    %340 = vector.broadcast %88 : f32 to vector<2x256xf32>
    %341 = arith.mulf %340, %145 : vector<2x256xf32>
    %342 = arith.addf %339, %341 : vector<2x256xf32>
    %343 = arith.addf %337, %342 : vector<2x256xf32>
    %344 = vector.broadcast %40 : f32 to vector<2x256xf32>
    %345 = arith.mulf %344, %150 : vector<2x256xf32>
    %346 = vector.broadcast %89 : f32 to vector<2x256xf32>
    %347 = arith.mulf %346, %153 : vector<2x256xf32>
    %348 = arith.addf %345, %347 : vector<2x256xf32>
    %349 = arith.addf %343, %348 : vector<2x256xf32>
    %350 = vector.broadcast %41 : f32 to vector<2x256xf32>
    %351 = arith.mulf %350, %160 : vector<2x256xf32>
    %352 = vector.broadcast %90 : f32 to vector<2x256xf32>
    %353 = arith.mulf %352, %163 : vector<2x256xf32>
    %354 = arith.addf %351, %353 : vector<2x256xf32>
    %355 = arith.addf %349, %354 : vector<2x256xf32>
    %356 = vector.broadcast %42 : f32 to vector<2x256xf32>
    %357 = arith.mulf %356, %170 : vector<2x256xf32>
    %358 = vector.broadcast %91 : f32 to vector<2x256xf32>
    %359 = arith.mulf %358, %173 : vector<2x256xf32>
    %360 = arith.addf %357, %359 : vector<2x256xf32>
    %361 = arith.addf %355, %360 : vector<2x256xf32>
    %362 = vector.broadcast %43 : f32 to vector<2x256xf32>
    %363 = arith.mulf %362, %180 : vector<2x256xf32>
    %364 = vector.broadcast %92 : f32 to vector<2x256xf32>
    %365 = arith.mulf %364, %183 : vector<2x256xf32>
    %366 = arith.addf %363, %365 : vector<2x256xf32>
    %367 = arith.addf %361, %366 : vector<2x256xf32>
    %368 = vector.extract_strided_slice %115 {offsets = [3, 0], sizes = [1, 256], strides = [1, 1]} : vector<7x256xf32> to vector<1x256xf32>
    %369 = vector.shape_cast %368 : vector<1x256xf32> to vector<256xf32>
    %370 = vector.shape_cast %369 : vector<256xf32> to vector<1x256xf32>
    %371 = vector.broadcast %370 : vector<1x256xf32> to vector<2x256xf32>
    %372 = arith.mulf %371, %367 : vector<2x256xf32>
    %373 = arith.addf %326, %372 : vector<2x256xf32>
    %374 = vector.broadcast %44 : f32 to vector<2x256xf32>
    %375 = arith.mulf %374, %122 : vector<2x256xf32>
    %376 = vector.broadcast %93 : f32 to vector<2x256xf32>
    %377 = arith.mulf %376, %125 : vector<2x256xf32>
    %378 = arith.addf %375, %377 : vector<2x256xf32>
    %379 = vector.broadcast %45 : f32 to vector<2x256xf32>
    %380 = arith.mulf %379, %132 : vector<2x256xf32>
    %381 = vector.broadcast %94 : f32 to vector<2x256xf32>
    %382 = arith.mulf %381, %135 : vector<2x256xf32>
    %383 = arith.addf %380, %382 : vector<2x256xf32>
    %384 = arith.addf %378, %383 : vector<2x256xf32>
    %385 = vector.broadcast %46 : f32 to vector<2x256xf32>
    %386 = arith.mulf %385, %142 : vector<2x256xf32>
    %387 = vector.broadcast %95 : f32 to vector<2x256xf32>
    %388 = arith.mulf %387, %145 : vector<2x256xf32>
    %389 = arith.addf %386, %388 : vector<2x256xf32>
    %390 = arith.addf %384, %389 : vector<2x256xf32>
    %391 = vector.broadcast %47 : f32 to vector<2x256xf32>
    %392 = arith.mulf %391, %150 : vector<2x256xf32>
    %393 = vector.broadcast %96 : f32 to vector<2x256xf32>
    %394 = arith.mulf %393, %153 : vector<2x256xf32>
    %395 = arith.addf %392, %394 : vector<2x256xf32>
    %396 = arith.addf %390, %395 : vector<2x256xf32>
    %397 = vector.broadcast %48 : f32 to vector<2x256xf32>
    %398 = arith.mulf %397, %160 : vector<2x256xf32>
    %399 = vector.broadcast %97 : f32 to vector<2x256xf32>
    %400 = arith.mulf %399, %163 : vector<2x256xf32>
    %401 = arith.addf %398, %400 : vector<2x256xf32>
    %402 = arith.addf %396, %401 : vector<2x256xf32>
    %403 = vector.broadcast %49 : f32 to vector<2x256xf32>
    %404 = arith.mulf %403, %170 : vector<2x256xf32>
    %405 = vector.broadcast %98 : f32 to vector<2x256xf32>
    %406 = arith.mulf %405, %173 : vector<2x256xf32>
    %407 = arith.addf %404, %406 : vector<2x256xf32>
    %408 = arith.addf %402, %407 : vector<2x256xf32>
    %409 = vector.broadcast %50 : f32 to vector<2x256xf32>
    %410 = arith.mulf %409, %180 : vector<2x256xf32>
    %411 = vector.broadcast %99 : f32 to vector<2x256xf32>
    %412 = arith.mulf %411, %183 : vector<2x256xf32>
    %413 = arith.addf %410, %412 : vector<2x256xf32>
    %414 = arith.addf %408, %413 : vector<2x256xf32>
    %c240_i32 = arith.constant 240 : i32
    %415 = tpu.dynamic_rotate %414 by %c240_i32 dim 1 : vector<2x256xf32>, i32 -> vector<2x256xf32>
    %416 = vector.extract_strided_slice %115 {offsets = [4, 0], sizes = [1, 256], strides = [1, 1]} : vector<7x256xf32> to vector<1x256xf32>
    %417 = vector.shape_cast %416 : vector<1x256xf32> to vector<256xf32>
    %418 = vector.shape_cast %417 : vector<256xf32> to vector<1x256xf32>
    %419 = vector.broadcast %418 : vector<1x256xf32> to vector<2x256xf32>
    %420 = arith.mulf %419, %415 : vector<2x256xf32>
    %421 = arith.addf %373, %420 : vector<2x256xf32>
    %422 = vector.broadcast %51 : f32 to vector<2x256xf32>
    %423 = arith.mulf %422, %122 : vector<2x256xf32>
    %424 = vector.broadcast %100 : f32 to vector<2x256xf32>
    %425 = arith.mulf %424, %125 : vector<2x256xf32>
    %426 = arith.addf %423, %425 : vector<2x256xf32>
    %427 = vector.broadcast %52 : f32 to vector<2x256xf32>
    %428 = arith.mulf %427, %132 : vector<2x256xf32>
    %429 = vector.broadcast %101 : f32 to vector<2x256xf32>
    %430 = arith.mulf %429, %135 : vector<2x256xf32>
    %431 = arith.addf %428, %430 : vector<2x256xf32>
    %432 = arith.addf %426, %431 : vector<2x256xf32>
    %433 = vector.broadcast %53 : f32 to vector<2x256xf32>
    %434 = arith.mulf %433, %142 : vector<2x256xf32>
    %435 = vector.broadcast %102 : f32 to vector<2x256xf32>
    %436 = arith.mulf %435, %145 : vector<2x256xf32>
    %437 = arith.addf %434, %436 : vector<2x256xf32>
    %438 = arith.addf %432, %437 : vector<2x256xf32>
    %439 = vector.broadcast %54 : f32 to vector<2x256xf32>
    %440 = arith.mulf %439, %150 : vector<2x256xf32>
    %441 = vector.broadcast %103 : f32 to vector<2x256xf32>
    %442 = arith.mulf %441, %153 : vector<2x256xf32>
    %443 = arith.addf %440, %442 : vector<2x256xf32>
    %444 = arith.addf %438, %443 : vector<2x256xf32>
    %445 = vector.broadcast %55 : f32 to vector<2x256xf32>
    %446 = arith.mulf %445, %160 : vector<2x256xf32>
    %447 = vector.broadcast %104 : f32 to vector<2x256xf32>
    %448 = arith.mulf %447, %163 : vector<2x256xf32>
    %449 = arith.addf %446, %448 : vector<2x256xf32>
    %450 = arith.addf %444, %449 : vector<2x256xf32>
    %451 = vector.broadcast %56 : f32 to vector<2x256xf32>
    %452 = arith.mulf %451, %170 : vector<2x256xf32>
    %453 = vector.broadcast %105 : f32 to vector<2x256xf32>
    %454 = arith.mulf %453, %173 : vector<2x256xf32>
    %455 = arith.addf %452, %454 : vector<2x256xf32>
    %456 = arith.addf %450, %455 : vector<2x256xf32>
    %457 = vector.broadcast %57 : f32 to vector<2x256xf32>
    %458 = arith.mulf %457, %180 : vector<2x256xf32>
    %459 = vector.broadcast %106 : f32 to vector<2x256xf32>
    %460 = arith.mulf %459, %183 : vector<2x256xf32>
    %461 = arith.addf %458, %460 : vector<2x256xf32>
    %462 = arith.addf %456, %461 : vector<2x256xf32>
    %c224_i32 = arith.constant 224 : i32
    %463 = tpu.dynamic_rotate %462 by %c224_i32 dim 1 : vector<2x256xf32>, i32 -> vector<2x256xf32>
    %464 = vector.extract_strided_slice %115 {offsets = [5, 0], sizes = [1, 256], strides = [1, 1]} : vector<7x256xf32> to vector<1x256xf32>
    %465 = vector.shape_cast %464 : vector<1x256xf32> to vector<256xf32>
    %466 = vector.shape_cast %465 : vector<256xf32> to vector<1x256xf32>
    %467 = vector.broadcast %466 : vector<1x256xf32> to vector<2x256xf32>
    %468 = arith.mulf %467, %463 : vector<2x256xf32>
    %469 = arith.addf %421, %468 : vector<2x256xf32>
    %470 = vector.broadcast %58 : f32 to vector<2x256xf32>
    %471 = arith.mulf %470, %122 : vector<2x256xf32>
    %472 = vector.broadcast %107 : f32 to vector<2x256xf32>
    %473 = arith.mulf %472, %125 : vector<2x256xf32>
    %474 = arith.addf %471, %473 : vector<2x256xf32>
    %475 = vector.broadcast %59 : f32 to vector<2x256xf32>
    %476 = arith.mulf %475, %132 : vector<2x256xf32>
    %477 = vector.broadcast %108 : f32 to vector<2x256xf32>
    %478 = arith.mulf %477, %135 : vector<2x256xf32>
    %479 = arith.addf %476, %478 : vector<2x256xf32>
    %480 = arith.addf %474, %479 : vector<2x256xf32>
    %481 = vector.broadcast %60 : f32 to vector<2x256xf32>
    %482 = arith.mulf %481, %142 : vector<2x256xf32>
    %483 = vector.broadcast %109 : f32 to vector<2x256xf32>
    %484 = arith.mulf %483, %145 : vector<2x256xf32>
    %485 = arith.addf %482, %484 : vector<2x256xf32>
    %486 = arith.addf %480, %485 : vector<2x256xf32>
    %487 = vector.broadcast %61 : f32 to vector<2x256xf32>
    %488 = arith.mulf %487, %150 : vector<2x256xf32>
    %489 = vector.broadcast %110 : f32 to vector<2x256xf32>
    %490 = arith.mulf %489, %153 : vector<2x256xf32>
    %491 = arith.addf %488, %490 : vector<2x256xf32>
    %492 = arith.addf %486, %491 : vector<2x256xf32>
    %493 = vector.broadcast %62 : f32 to vector<2x256xf32>
    %494 = arith.mulf %493, %160 : vector<2x256xf32>
    %495 = vector.broadcast %111 : f32 to vector<2x256xf32>
    %496 = arith.mulf %495, %163 : vector<2x256xf32>
    %497 = arith.addf %494, %496 : vector<2x256xf32>
    %498 = arith.addf %492, %497 : vector<2x256xf32>
    %499 = vector.broadcast %63 : f32 to vector<2x256xf32>
    %500 = arith.mulf %499, %170 : vector<2x256xf32>
    %501 = vector.broadcast %112 : f32 to vector<2x256xf32>
    %502 = arith.mulf %501, %173 : vector<2x256xf32>
    %503 = arith.addf %500, %502 : vector<2x256xf32>
    %504 = arith.addf %498, %503 : vector<2x256xf32>
    %505 = vector.broadcast %64 : f32 to vector<2x256xf32>
    %506 = arith.mulf %505, %180 : vector<2x256xf32>
    %507 = vector.broadcast %113 : f32 to vector<2x256xf32>
    %508 = arith.mulf %507, %183 : vector<2x256xf32>
    %509 = arith.addf %506, %508 : vector<2x256xf32>
    %510 = arith.addf %504, %509 : vector<2x256xf32>
    %c208_i32 = arith.constant 208 : i32
    %511 = tpu.dynamic_rotate %510 by %c208_i32 dim 1 : vector<2x256xf32>, i32 -> vector<2x256xf32>
    %512 = vector.extract_strided_slice %115 {offsets = [6, 0], sizes = [1, 256], strides = [1, 1]} : vector<7x256xf32> to vector<1x256xf32>
    %513 = vector.shape_cast %512 : vector<1x256xf32> to vector<256xf32>
    %514 = vector.shape_cast %513 : vector<256xf32> to vector<1x256xf32>
    %515 = vector.broadcast %514 : vector<1x256xf32> to vector<2x256xf32>
    %516 = arith.mulf %515, %511 : vector<2x256xf32>
    %517 = arith.addf %469, %516 : vector<2x256xf32>
    %518 = arith.negf %517 : vector<2x256xf32>
    %519 = math.exp %518 : vector<2x256xf32>
    %cst_22 = arith.constant 1.000000e+00 : f32
    %520 = vector.broadcast %cst_22 : f32 to vector<2x256xf32>
    %521 = arith.addf %520, %519 : vector<2x256xf32>
    %522 = arith.divf %520, %521 : vector<2x256xf32>
    %c0_23 = arith.constant 0 : index
    %c0_24 = arith.constant 0 : index
    %523 = vector.load %arg5[%c0_23, %c0_24] : memref<2x256xf32, #tpu.memory_space<vmem>>, vector<2x256xf32>
    tpu.vector_store %arg5[%c0_23, %c0_24], %522 {strides = array<i32>} : memref<2x256xf32, #tpu.memory_space<vmem>>, vector<2x256xf32>,
    return
  }
  func.func @transform_0(%arg0: i32, %arg1: memref<98xf32, #tpu.memory_space<smem>>) -> (i32, i32, i32) {
    %c0_i32 = arith.constant 0 : i32
    %c0_i32_0 = arith.constant 0 : i32
    %c0_i32_1 = arith.constant 0 : i32
    return %arg0, %c0_i32, %c0_i32_0 : i32, i32, i32
  }
  func.func @transform_1(%arg0: i32, %arg1: memref<98xf32, #tpu.memory_space<smem>>) -> (i32, i32) {
    %c0_i32 = arith.constant 0 : i32
    %c0_i32_0 = arith.constant 0 : i32
    %c0_i32_1 = arith.constant 0 : i32
    return %c0_i32, %c0_i32_0 : i32, i32
  }
  func.func @transform_2(%arg0: i32, %arg1: memref<98xf32, #tpu.memory_space<smem>>) -> (i32, i32) {
    %c0_i32 = arith.constant 0 : i32
    %c0_i32_0 = arith.constant 0 : i32
    %c0_i32_1 = arith.constant 0 : i32
    return %c0_i32, %c0_i32_0 : i32, i32
  }
  func.func @transform_3(%arg0: i32, %arg1: memref<98xf32, #tpu.memory_space<smem>>) -> (i32, i32) {
    %c0_i32 = arith.constant 0 : i32
    %c0_i32_0 = arith.constant 0 : i32
    return %arg0, %c0_i32 : i32, i32
  }
}

</mosaic_0001>

<llo_original>
// kernel: tpu_custom_call.1
$region0: #{tpu_custom_call.1}
  #allocation0 [shape = 'u32[]', space=smem, size = 0x4, offset = 0x4, fixed_abs, tag = 'smem constant byte address 0x4 - core index']
  #allocation1 [shape = 'u32[144,128]{1,0:T(1,128)}', space=vmem, size = 0x12000, scoped, tag = 'internal scratch']
  #allocation2 [shape = 's32[1]{0}', space=sflag, size = 0x4, scoped, tag = 'scoped memory for tpu_custom_call.1']
  #allocation3 [shape = 'u8[512]{0}', space=smem, size = 0x200, scoped, tag = 'prefetched SMEM operand 0']
  %s0 = inlined_call_operand.hbm [shape: f32[98], index: 0, kind: input, shape index: {}]
  %s1 = inlined_call_operand.hbm [shape: f32[2,4,256], index: 1, kind: input, shape index: {}]
  %s2 = inlined_call_operand.hbm [shape: f32[7,256], index: 2, kind: input, shape index: {}]
  %s3 = inlined_call_operand.hbm [shape: f32[7,256], index: 3, kind: input, shape index: {}]
  %s4 = inlined_call_operand.hbm [shape: f32[2,256], index: 4, kind: output, shape index: {}]
  %s5 = sld [smem:[#allocation0]]
  $region34: #{tpu_custom_call.1} parent=0
    _
  %s7 = ssub.s32 1, %s5
  %s8 = scalar_select 0, %s7, %s5
  %10 = dma.hbm_to_smem %s0, 16, [#allocation3], [#allocation2]
  %11 = dma.done [#allocation2], 16
  %12 = sfence
  $region1: #{tpu_custom_call.1} parent=0
    #allocation4 [shape = 'u8[8192]{0}', space=vmem, size = 0x2000, scoped, tag = 'input window, operand 1, single buffered']
    #allocation5 [shape = 's32[1]{0}', space=sflag, size = 0x4, scoped, tag = 'scoped memory for tpu_custom_call.1']
    #allocation6 [shape = 's32[1]{0}', space=sflag, size = 0x4, scoped, tag = 'scoped memory for tpu_custom_call.1']
    #allocation7 [shape = 'u8[8192]{0}', space=vmem, size = 0x2000, scoped, tag = 'input window, operand 2, single buffered']
    #allocation8 [shape = 's32[1]{0}', space=sflag, size = 0x4, scoped, tag = 'scoped memory for tpu_custom_call.1']
    #allocation9 [shape = 'u8[8192]{0}', space=vmem, size = 0x2000, scoped, tag = 'input window, operand 3, single buffered']
    #allocation10 [shape = 'u8[2048]{0}', space=vmem, size = 0x800, scoped, tag = 'output window, operand 0, single buffered']
    %13 = vsyncpa [#allocation5], 0
    %14 = vsyncpa [#allocation8], 0
    %15 = vsyncpa [#allocation6], 0
    // Predicated region
    $region2: #{tpu_custom_call.1} parent=1 // pred_check
      _
    $region3: #{tpu_custom_call.1} parent=1 // pred_check_branch
      %17 = sbr.rel (0) target = $region5
    $region4: #{tpu_custom_call.1} parent=1 // pred_region
      %s19 = ssub.s32 256, 256
      %20 = vsyncadd [#allocation5], %s19
      %s21 = sshll.u32 [#allocation4], 4
      %s22 = int_to_ptr.vmem [resolvable:$true] %s21
      %27 = dma.hbm_to_vmem [thread:$0]  %s1, 256, %s22, [#allocation5], 128, 128, 8
    $region5: #{tpu_custom_call.1} parent=1 // pred_fallthru
      _
    // Predicated region
    $region6: #{tpu_custom_call.1} parent=1 // pred_check
      _
    $region7: #{tpu_custom_call.1} parent=1 // pred_check_branch
      %29 = sbr.rel (0) target = $region9
    $region8: #{tpu_custom_call.1} parent=1 // pred_region
      %s31 = ssub.s32 256, 256
      %32 = vsyncadd [#allocation8], %s31
      %s34 = sshll.u32 [#allocation7], 4
      %s35 = int_to_ptr.vmem [resolvable:$true] %s34
      %37 = dma.hbm_to_vmem [thread:$0]  %s2, 256, %s35, [#allocation8]
    $region9: #{tpu_custom_call.1} parent=1 // pred_fallthru
      _
    // Predicated region
    $region10: #{tpu_custom_call.1} parent=1 // pred_check
      _
    $region11: #{tpu_custom_call.1} parent=1 // pred_check_branch
      %39 = sbr.rel (0) target = $region13
    $region12: #{tpu_custom_call.1} parent=1 // pred_region
      %s41 = ssub.s32 256, 256
      %42 = vsyncadd [#allocation8], %s41
      %s44 = sshll.u32 [#allocation9], 4
      %s45 = int_to_ptr.vmem [resolvable:$true] %s44
      %47 = dma.hbm_to_vmem [thread:$0]  %s3, 256, %s45, [#allocation8]
    $region13: #{tpu_custom_call.1} parent=1 // pred_fallthru
      _
    // Predicated region
    $region14: #{tpu_custom_call.1} parent=1 // pred_check
      _
    $region15: #{tpu_custom_call.1} parent=1 // pred_check_branch
      %49 = sbr.rel (0) target = $region17
    $region16: #{tpu_custom_call.1} parent=1 // pred_region
      %50 = dma.done [#allocation5], 256
    $region17: #{tpu_custom_call.1} parent=1 // pred_fallthru
      _
    // Predicated region
    $region18: #{tpu_custom_call.1} parent=1 // pred_check
      _
    $region19: #{tpu_custom_call.1} parent=1 // pred_check_branch
      %52 = sbr.rel (0) target = $region21
    $region20: #{tpu_custom_call.1} parent=1 // pred_region
      %53 = dma.done [#allocation8], 256
    $region21: #{tpu_custom_call.1} parent=1 // pred_fallthru
      _
    // Predicated region
    $region22: #{tpu_custom_call.1} parent=1 // pred_check
      _
    $region23: #{tpu_custom_call.1} parent=1 // pred_check_branch
      %55 = sbr.rel (0) target = $region25
    $region24: #{tpu_custom_call.1} parent=1 // pred_region
      %56 = dma.done [#allocation8], 256
    $region25: #{tpu_custom_call.1} parent=1 // pred_fallthru
      _
    %v57 = vld [vmem:[#allocation4] ss:$4 sm:$0x3]
    %s58 = scalar_lea.vmem [#allocation4], 8
    %v59 = vld [vmem:[%s58] ss:$4 sm:$0x3]
    %s60 = scalar_lea.vmem [#allocation4], 1
    %v61 = vld [vmem:[%s60] ss:$4 sm:$0x3]
    %s62 = scalar_lea.vmem [#allocation4], 9
    %v63 = vld [vmem:[%s62] ss:$4 sm:$0x3]
    %v64 = vadd.f32 %v57, %v61
    %v65 = vadd.f32 %v59, %v63
    %v66 = vmax.f32 %v57, %v61
    %v67 = vmax.f32 %v59, %v63
    %s68 = scalar_lea.vmem [#allocation4], 2
    %v69 = vld [vmem:[%s68] ss:$4 sm:$0x3]
    %s70 = scalar_lea.vmem [#allocation4], 10
    %v71 = vld [vmem:[%s70] ss:$4 sm:$0x3]
    %v72 = vadd.f32 %v64, %v69
    %v73 = vadd.f32 %v65, %v71
    %v74 = vmax.f32 %v66, %v69
    %v75 = vmax.f32 %v67, %v71
    %s76 = scalar_lea.vmem [#allocation4], 3
    %v77 = vld [vmem:[%s76] ss:$4 sm:$0x3]
    %s78 = scalar_lea.vmem [#allocation4], 11
    %v79 = vld [vmem:[%s78] ss:$4 sm:$0x3]
    %v80 = vadd.f32 %v72, %v77
    %v81 = vadd.f32 %v73, %v79
    %v82 = vmax.f32 %v74, %v77
    %v83 = vmax.f32 %v75, %v79
    %v84 = vmul.f32 %v80, 0.25
    %v85 = vmul.f32 %v81, 0.25
    %s86 = sld [smem:[#allocation3]]
    %s87 = sld [smem:[#allocation3 + $0x1]]
    %s88 = sld [smem:[#allocation3 + $0x2]]
    %s89 = sld [smem:[#allocation3 + $0x3]]
    %s90 = sld [smem:[#allocation3 + $0x4]]
    %s91 = sld [smem:[#allocation3 + $0x5]]
    %s92 = sld [smem:[#allocation3 + $0x6]]
    %s93 = sld [smem:[#allocation3 + $0x7]]
    %s94 = sld [smem:[#allocation3 + $0x8]]
    %s95 = sld [smem:[#allocation3 + $0x9]]
    %s96 = sld [smem:[#allocation3 + $0xa]]
    %s97 = sld [smem:[#allocation3 + $0xb]]
    %s98 = sld [smem:[#allocation3 + $0xc]]
    %s99 = sld [smem:[#allocation3 + $0xd]]
    %s100 = sld [smem:[#allocation3 + $0xe]]
    %s101 = sld [smem:[#allocation3 + $0xf]]
    %s102 = sld [smem:[#allocation3 + $0x10]]
    %s103 = sld [smem:[#allocation3 + $0x11]]
    %s104 = sld [smem:[#allocation3 + $0x12]]
    %s105 = sld [smem:[#allocation3 + $0x13]]
    %s106 = sld [smem:[#allocation3 + $0x14]]
    %s107 = sld [smem:[#allocation3 + $0x15]]
    %s108 = sld [smem:[#allocation3 + $0x16]]
    %s109 = sld [smem:[#allocation3 + $0x17]]
    %s110 = sld [smem:[#allocation3 + $0x18]]
    %s111 = sld [smem:[#allocation3 + $0x19]]
    %s112 = sld [smem:[#allocation3 + $0x1a]]
    %s113 = sld [smem:[#allocation3 + $0x1b]]
    %s114 = sld [smem:[#allocation3 + $0x1c]]
    %s115 = sld [smem:[#allocation3 + $0x1d]]
    %s116 = sld [smem:[#allocation3 + $0x1e]]
    %s117 = sld [smem:[#allocation3 + $0x1f]]
    %s118 = sld [smem:[#allocation3 + $0x20]]
    %s119 = sld [smem:[#allocation3 + $0x21]]
    %s120 = sld [smem:[#allocation3 + $0x22]]
    %s121 = sld [smem:[#allocation3 + $0x23]]
    %s122 = sld [smem:[#allocation3 + $0x24]]
    %s123 = sld [smem:[#allocation3 + $0x25]]
    %s124 = sld [smem:[#allocation3 + $0x26]]
    %s125 = sld [smem:[#allocation3 + $0x27]]
    %s126 = sld [smem:[#allocation3 + $0x28]]
    %s127 = sld [smem:[#allocation3 + $0x29]]
    %s128 = sld [smem:[#allocation3 + $0x2a]]
    %s129 = sld [smem:[#allocation3 + $0x2b]]
    %s130 = sld [smem:[#allocation3 + $0x2c]]
    %s131 = sld [smem:[#allocation3 + $0x2d]]
    %s132 = sld [smem:[#allocation3 + $0x2e]]
    %s133 = sld [smem:[#allocation3 + $0x2f]]
    %s134 = sld [smem:[#allocation3 + $0x30]]
    %s135 = sld [smem:[#allocation3 + $0x31]]
    %s136 = sld [smem:[#allocation3 + $0x32]]
    %s137 = sld [smem:[#allocation3 + $0x33]]
    %s138 = sld [smem:[#allocation3 + $0x34]]
    %s139 = sld [smem:[#allocation3 + $0x35]]
    %s140 = sld [smem:[#allocation3 + $0x36]]
    %s141 = sld [smem:[#allocation3 + $0x37]]
    %s142 = sld [smem:[#allocation3 + $0x38]]
    %s143 = sld [smem:[#allocation3 + $0x39]]
    %s144 = sld [smem:[#allocation3 + $0x3a]]
    %s145 = sld [smem:[#allocation3 + $0x3b]]
    %s146 = sld [smem:[#allocation3 + $0x3c]]
    %s147 = sld [smem:[#allocation3 + $0x3d]]
    %s148 = sld [smem:[#allocation3 + $0x3e]]
    %s149 = sld [smem:[#allocation3 + $0x3f]]
    %s150 = sld [smem:[#allocation3 + $0x40]]
    %s151 = sld [smem:[#allocation3 + $0x41]]
    %s152 = sld [smem:[#allocation3 + $0x42]]
    %s153 = sld [smem:[#allocation3 + $0x43]]
    %s154 = sld [smem:[#allocation3 + $0x44]]
    %s155 = sld [smem:[#allocation3 + $0x45]]
    %s156 = sld [smem:[#allocation3 + $0x46]]
    %s157 = sld [smem:[#allocation3 + $0x47]]
    %s158 = sld [smem:[#allocation3 + $0x48]]
    %s159 = sld [smem:[#allocation3 + $0x49]]
    %s160 = sld [smem:[#allocation3 + $0x4a]]
    %s161 = sld [smem:[#allocation3 + $0x4b]]
    %s162 = sld [smem:[#allocation3 + $0x4c]]
    %s163 = sld [smem:[#allocation3 + $0x4d]]
    %s164 = sld [smem:[#allocation3 + $0x4e]]
    %s165 = sld [smem:[#allocation3 + $0x4f]]
    %s166 = sld [smem:[#allocation3 + $0x50]]
    %s167 = sld [smem:[#allocation3 + $0x51]]
    %s168 = sld [smem:[#allocation3 + $0x52]]
    %s169 = sld [smem:[#allocation3 + $0x53]]
    %s170 = sld [smem:[#allocation3 + $0x54]]
    %s171 = sld [smem:[#allocation3 + $0x55]]
    %s172 = sld [smem:[#allocation3 + $0x56]]
    %s173 = sld [smem:[#allocation3 + $0x57]]
    %s174 = sld [smem:[#allocation3 + $0x58]]
    %s175 = sld [smem:[#allocation3 + $0x59]]
    %s176 = sld [smem:[#allocation3 + $0x5a]]
    %s177 = sld [smem:[#allocation3 + $0x5b]]
    %s178 = sld [smem:[#allocation3 + $0x5c]]
    %s179 = sld [smem:[#allocation3 + $0x5d]]
    %s180 = sld [smem:[#allocation3 + $0x5e]]
    %s181 = sld [smem:[#allocation3 + $0x5f]]
    %s182 = sld [smem:[#allocation3 + $0x60]]
    %s183 = sld [smem:[#allocation3 + $0x61]]
    %v184 = vld [vmem:[#allocation7] sm:$0x7f]
    %v185 = vld [vmem:[#allocation7 + $0x8] sm:$0x7f]
    %v186 = vld [vmem:[#allocation9] sm:$0x7f]
    %v187 = vld [vmem:[#allocation9 + $0x8] sm:$0x7f]
    %v190 = vcombine.low %v84, %v85
    %v192 = vunpack.c.l.s4 1966171168
    %v193 = vunpack.c.0.s8 %v192
    %v194 = vlaneseq
    %v195 = vshrl.u32 %v194, 7
    %v196 = vsub.s32 %v193, %v195
    %v197 = vrot.slane %v190, %v196
    %v198 = vcombine.high %v197, %v197
    %v200 = vunpack.c.l.s4 1966171168
    %v201 = vunpack.c.0.s8 %v200
    %v202 = vlaneseq
    %v203 = vshrl.u32 %v202, 7
    %v204 = vsub.s32 %v201, %v203
    %v205 = vrot.slane %v197, %v204
    %v207 = vunpack.c.l.s4 1966171168
    %v208 = vunpack.c.0.s8 %v207
    %v209 = vlaneseq
    %v210 = vshrl.u32 %v209, 7
    %v211 = vsub.s32 %v208, %v210
    %v212 = vrot.slane %v198, %v211
    %215 = vrot.lane.b32.xlu0 %v205, 3
    %v216 = vpop.permute.xlu0 %215
    %217 = vrot.lane.b32.xlu0 %v212, 3
    %v218 = vpop.permute.xlu0 %217
    %v219 = vlaneseq
    %v220 = vand.u32 %v219, 127
    %vm221 = vcmp.lt.s32.totalorder %v220, 3
    %v222 = vsel %vm221, %v216, %v218
    %v223 = vsel %vm221, %v218, %v216
    %v226 = vcombine.low %v82, %v83
    %v228 = vunpack.c.l.s4 1966171168
    %v229 = vunpack.c.0.s8 %v228
    %v230 = vlaneseq
    %v231 = vshrl.u32 %v230, 7
    %v232 = vsub.s32 %v229, %v231
    %v233 = vrot.slane %v226, %v232
    %v234 = vcombine.high %v233, %v233
    %v236 = vunpack.c.l.s4 1966171168
    %v237 = vunpack.c.0.s8 %v236
    %v238 = vlaneseq
    %v239 = vshrl.u32 %v238, 7
    %v240 = vsub.s32 %v237, %v239
    %v241 = vrot.slane %v233, %v240
    %v243 = vunpack.c.l.s4 1966171168
    %v244 = vunpack.c.0.s8 %v243
    %v245 = vlaneseq
    %v246 = vshrl.u32 %v245, 7
    %v247 = vsub.s32 %v244, %v246
    %v248 = vrot.slane %v234, %v247
    %251 = vrot.lane.b32.xlu0 %v241, 3
    %v252 = vpop.permute.xlu0 %251
    %253 = vrot.lane.b32.xlu0 %v248, 3
    %v254 = vpop.permute.xlu0 %253
    %v255 = vsel %vm221, %v252, %v254
    %v256 = vsel %vm221, %v254, %v252
    %v257 = vlaneseq
    %v258 = vshrl.u32 %v257, 7
    %v259 = vsub.s32 0, %v258
    %v260 = vrot.slane %v184, %v259
    %v261 = vlaneseq
    %v262 = vshrl.u32 %v261, 7
    %v263 = vsub.s32 0, %v262
    %v264 = vrot.slane %v185, %v263
    %v265 = vmul.f32 %v260, %v223
    %v266 = vmul.f32 %v264, %v222
    %v267 = vmul.f32 %v260, %v256
    %v268 = vmul.f32 %v264, %v255
    %269 = vrot.lane.b32.xlu0 %v205, 2
    %v270 = vpop.permute.xlu0 %269
    %271 = vrot.lane.b32.xlu0 %v212, 2
    %v272 = vpop.permute.xlu0 %271
    %vm273 = vcmp.lt.s32.totalorder %v220, 2
    %v274 = vsel %vm273, %v270, %v272
    %v275 = vsel %vm273, %v272, %v270
    %276 = vrot.lane.b32.xlu0 %v241, 2
    %v277 = vpop.permute.xlu0 %276
    %278 = vrot.lane.b32.xlu0 %v248, 2
    %v279 = vpop.permute.xlu0 %278
    %v280 = vsel %vm273, %v277, %v279
    %v281 = vsel %vm273, %v279, %v277
    %v282 = vlaneseq
    %v283 = vshrl.u32 %v282, 7
    %v284 = vsub.s32 1, %v283
    %v285 = vrot.slane %v184, %v284
    %v286 = vlaneseq
    %v287 = vshrl.u32 %v286, 7
    %v288 = vsub.s32 1, %v287
    %v289 = vrot.slane %v185, %v288
    %v290 = vmul.f32 %v285, %v275
    %v291 = vmul.f32 %v289, %v274
    %v292 = vmul.f32 %v285, %v281
    %v293 = vmul.f32 %v289, %v280
    %294 = vrot.lane.b32.xlu0 %v205, 1
    %v295 = vpop.permute.xlu0 %294
    %296 = vrot.lane.b32.xlu0 %v212, 1
    %v297 = vpop.permute.xlu0 %296
    %vm298 = vcmp.lt.s32.totalorder %v220, 1
    %v299 = vsel %vm298, %v295, %v297
    %v300 = vsel %vm298, %v297, %v295
    %301 = vrot.lane.b32.xlu0 %v241, 1
    %v302 = vpop.permute.xlu0 %301
    %303 = vrot.lane.b32.xlu0 %v248, 1
    %v304 = vpop.permute.xlu0 %303
    %v305 = vsel %vm298, %v302, %v304
    %v306 = vsel %vm298, %v304, %v302
    %v307 = vlaneseq
    %v308 = vshrl.u32 %v307, 7
    %v309 = vsub.s32 2, %v308
    %v310 = vrot.slane %v184, %v309
    %v311 = vlaneseq
    %v312 = vshrl.u32 %v311, 7
    %v313 = vsub.s32 2, %v312
    %v314 = vrot.slane %v185, %v313
    %v315 = vmul.f32 %v310, %v300
    %v316 = vmul.f32 %v314, %v299
    %v317 = vmul.f32 %v310, %v306
    %v318 = vmul.f32 %v314, %v305
    %v319 = vlaneseq
    %v320 = vshrl.u32 %v319, 7
    %v321 = vsub.s32 3, %v320
    %v322 = vrot.slane %v184, %v321
    %v323 = vlaneseq
    %v324 = vshrl.u32 %v323, 7
    %v325 = vsub.s32 3, %v324
    %v326 = vrot.slane %v185, %v325
    %v327 = vmul.f32 %v322, %v205
    %v328 = vmul.f32 %v326, %v212
    %v329 = vmul.f32 %v322, %v241
    %v330 = vmul.f32 %v326, %v248
    %331 = vrot.lane.b32.xlu0 %v205, 127
    %v332 = vpop.permute.xlu0 %331
    %333 = vrot.lane.b32.xlu0 %v212, 127
    %v334 = vpop.permute.xlu0 %333
    %vm335 = vcmp.lt.s32.totalorder %v220, 127
    %v336 = vsel %vm335, %v332, %v334
    %v337 = vsel %vm335, %v334, %v332
    %338 = vrot.lane.b32.xlu0 %v241, 127
    %v339 = vpop.permute.xlu0 %338
    %340 = vrot.lane.b32.xlu0 %v248, 127
    %v341 = vpop.permute.xlu0 %340
    %v342 = vsel %vm335, %v339, %v341
    %v343 = vsel %vm335, %v341, %v339
    %v344 = vlaneseq
    %v345 = vshrl.u32 %v344, 7
    %v346 = vsub.s32 4, %v345
    %v347 = vrot.slane %v184, %v346
    %v348 = vlaneseq
    %v349 = vshrl.u32 %v348, 7
    %v350 = vsub.s32 4, %v349
    %v351 = vrot.slane %v185, %v350
    %v352 = vmul.f32 %v347, %v336
    %v353 = vmul.f32 %v351, %v337
    %v354 = vmul.f32 %v347, %v342
    %v355 = vmul.f32 %v351, %v343
    %356 = vrot.lane.b32.xlu0 %v205, 126
    %v357 = vpop.permute.xlu0 %356
    %358 = vrot.lane.b32.xlu0 %v212, 126
    %v359 = vpop.permute.xlu0 %358
    %vm360 = vcmp.lt.s32.totalorder %v220, 126
    %v361 = vsel %vm360, %v357, %v359
    %v362 = vsel %vm360, %v359, %v357
    %363 = vrot.lane.b32.xlu0 %v241, 126
    %v364 = vpop.permute.xlu0 %363
    %365 = vrot.lane.b32.xlu0 %v248, 126
    %v366 = vpop.permute.xlu0 %365
    %v367 = vsel %vm360, %v364, %v366
    %v368 = vsel %vm360, %v366, %v364
    %v369 = vlaneseq
    %v370 = vshrl.u32 %v369, 7
    %v371 = vsub.s32 5, %v370
    %v372 = vrot.slane %v184, %v371
    %v373 = vlaneseq
    %v374 = vshrl.u32 %v373, 7
    %v375 = vsub.s32 5, %v374
    %v376 = vrot.slane %v185, %v375
    %v377 = vmul.f32 %v372, %v361
    %v378 = vmul.f32 %v376, %v362
    %v379 = vmul.f32 %v372, %v367
    %v380 = vmul.f32 %v376, %v368
    %381 = vrot.lane.b32.xlu0 %v205, 125
    %v382 = vpop.permute.xlu0 %381
    %383 = vrot.lane.b32.xlu0 %v212, 125
    %v384 = vpop.permute.xlu0 %383
    %vm385 = vcmp.lt.s32.totalorder %v220, 125
    %v386 = vsel %vm385, %v382, %v384
    %v387 = vsel %vm385, %v384, %v382
    %388 = vrot.lane.b32.xlu0 %v241, 125
    %v389 = vpop.permute.xlu0 %388
    %390 = vrot.lane.b32.xlu0 %v248, 125
    %v391 = vpop.permute.xlu0 %390
    %v392 = vsel %vm385, %v389, %v391
    %v393 = vsel %vm385, %v391, %v389
    %v394 = vlaneseq
    %v395 = vshrl.u32 %v394, 7
    %v396 = vsub.s32 6, %v395
    %v397 = vrot.slane %v184, %v396
    %v398 = vlaneseq
    %v399 = vshrl.u32 %v398, 7
    %v400 = vsub.s32 6, %v399
    %v401 = vrot.slane %v185, %v400
    %v402 = vmul.f32 %v397, %v386
    %v403 = vmul.f32 %v401, %v387
    %v404 = vmul.f32 %v397, %v392
    %v405 = vmul.f32 %v401, %v393
    %v406 = vstv %s86
    %v407 = vmul.f32 %v406, %v265
    %v408 = vmul.f32 %v406, %v266
    %v409 = vstv %s135
    %v410 = vmul.f32 %v409, %v267
    %v411 = vmul.f32 %v409, %v268
    %v412 = vadd.f32 %v407, %v410
    %v413 = vadd.f32 %v408, %v411
    %v414 = vstv %s87
    %v415 = vmul.f32 %v414, %v290
    %v416 = vmul.f32 %v414, %v291
    %v417 = vstv %s136
    %v418 = vmul.f32 %v417, %v292
    %v419 = vmul.f32 %v417, %v293
    %v420 = vadd.f32 %v415, %v418
    %v421 = vadd.f32 %v416, %v419
    %v422 = vadd.f32 %v412, %v420
    %v423 = vadd.f32 %v413, %v421
    %v424 = vstv %s88
    %v425 = vmul.f32 %v424, %v315
    %v426 = vmul.f32 %v424, %v316
    %v427 = vstv %s137
    %v428 = vmul.f32 %v427, %v317
    %v429 = vmul.f32 %v427, %v318
    %v430 = vadd.f32 %v425, %v428
    %v431 = vadd.f32 %v426, %v429
    %v432 = vadd.f32 %v422, %v430
    %v433 = vadd.f32 %v423, %v431
    %v434 = vstv %s89
    %v435 = vmul.f32 %v434, %v327
    %v436 = vmul.f32 %v434, %v328
    %v437 = vstv %s138
    %v438 = vmul.f32 %v437, %v329
    %v439 = vmul.f32 %v437, %v330
    %v440 = vadd.f32 %v435, %v438
    %v441 = vadd.f32 %v436, %v439
    %v442 = vadd.f32 %v432, %v440
    %v443 = vadd.f32 %v433, %v441
    %v444 = vstv %s90
    %v445 = vmul.f32 %v444, %v352
    %v446 = vmul.f32 %v444, %v353
    %v447 = vstv %s139
    %v448 = vmul.f32 %v447, %v354
    %v449 = vmul.f32 %v447, %v355
    %v450 = vadd.f32 %v445, %v448
    %v451 = vadd.f32 %v446, %v449
    %v452 = vadd.f32 %v442, %v450
    %v453 = vadd.f32 %v443, %v451
    %v454 = vstv %s91
    %v455 = vmul.f32 %v454, %v377
    %v456 = vmul.f32 %v454, %v378
    %v457 = vstv %s140
    %v458 = vmul.f32 %v457, %v379
    %v459 = vmul.f32 %v457, %v380
    %v460 = vadd.f32 %v455, %v458
    %v461 = vadd.f32 %v456, %v459
    %v462 = vadd.f32 %v452, %v460
    %v463 = vadd.f32 %v453, %v461
    %v464 = vstv %s92
    %v465 = vmul.f32 %v464, %v402
    %v466 = vmul.f32 %v464, %v403
    %v467 = vstv %s141
    %v468 = vmul.f32 %v467, %v404
    %v469 = vmul.f32 %v467, %v405
    %v470 = vadd.f32 %v465, %v468
    %v471 = vadd.f32 %v466, %v469
    %v472 = vadd.f32 %v462, %v470
    %v473 = vadd.f32 %v463, %v471
    %474 = vrot.lane.b32.xlu0 %v472, 48
    %v475 = vpop.permute.xlu0 %474
    %476 = vrot.lane.b32.xlu0 %v473, 48
    %v477 = vpop.permute.xlu0 %476
    %vm478 = vcmp.lt.s32.totalorder %v220, 48
    %v479 = vsel %vm478, %v475, %v477
    %v480 = vsel %vm478, %v477, %v475
    %v481 = vlaneseq
    %v482 = vshrl.u32 %v481, 7
    %v483 = vsub.s32 0, %v482
    %v484 = vrot.slane %v186, %v483
    %v485 = vlaneseq
    %v486 = vshrl.u32 %v485, 7
    %v487 = vsub.s32 0, %v486
    %v488 = vrot.slane %v187, %v487
    %v489 = vmul.f32 %v484, %v480
    %v490 = vmul.f32 %v488, %v479
    %v491 = vstv %s93
    %v492 = vmul.f32 %v491, %v265
    %v493 = vmul.f32 %v491, %v266
    %v494 = vstv %s142
    %v495 = vmul.f32 %v494, %v267
    %v496 = vmul.f32 %v494, %v268
    %v497 = vadd.f32 %v492, %v495
    %v498 = vadd.f32 %v493, %v496
    %v499 = vstv %s94
    %v500 = vmul.f32 %v499, %v290
    %v501 = vmul.f32 %v499, %v291
    %v502 = vstv %s143
    %v503 = vmul.f32 %v502, %v292
    %v504 = vmul.f32 %v502, %v293
    %v505 = vadd.f32 %v500, %v503
    %v506 = vadd.f32 %v501, %v504
    %v507 = vadd.f32 %v497, %v505
    %v508 = vadd.f32 %v498, %v506
    %v509 = vstv %s95
    %v510 = vmul.f32 %v509, %v315
    %v511 = vmul.f32 %v509, %v316
    %v512 = vstv %s144
    %v513 = vmul.f32 %v512, %v317
    %v514 = vmul.f32 %v512, %v318
    %v515 = vadd.f32 %v510, %v513
    %v516 = vadd.f32 %v511, %v514
    %v517 = vadd.f32 %v507, %v515
    %v518 = vadd.f32 %v508, %v516
    %v519 = vstv %s96
    %v520 = vmul.f32 %v519, %v327
    %v521 = vmul.f32 %v519, %v328
    %v522 = vstv %s145
    %v523 = vmul.f32 %v522, %v329
    %v524 = vmul.f32 %v522, %v330
    %v525 = vadd.f32 %v520, %v523
    %v526 = vadd.f32 %v521, %v524
    %v527 = vadd.f32 %v517, %v525
    %v528 = vadd.f32 %v518, %v526
    %v529 = vstv %s97
    %v530 = vmul.f32 %v529, %v352
    %v531 = vmul.f32 %v529, %v353
    %v532 = vstv %s146
    %v533 = vmul.f32 %v532, %v354
    %v534 = vmul.f32 %v532, %v355
    %v535 = vadd.f32 %v530, %v533
    %v536 = vadd.f32 %v531, %v534
    %v537 = vadd.f32 %v527, %v535
    %v538 = vadd.f32 %v528, %v536
    %v539 = vstv %s98
    %v540 = vmul.f32 %v539, %v377
    %v541 = vmul.f32 %v539, %v378
    %v542 = vstv %s147
    %v543 = vmul.f32 %v542, %v379
    %v544 = vmul.f32 %v542, %v380
    %v545 = vadd.f32 %v540, %v543
    %v546 = vadd.f32 %v541, %v544
    %v547 = vadd.f32 %v537, %v545
    %v548 = vadd.f32 %v538, %v546
    %v549 = vstv %s99
    %v550 = vmul.f32 %v549, %v402
    %v551 = vmul.f32 %v549, %v403
    %v552 = vstv %s148
    %v553 = vmul.f32 %v552, %v404
    %v554 = vmul.f32 %v552, %v405
    %v555 = vadd.f32 %v550, %v553
    %v556 = vadd.f32 %v551, %v554
    %v557 = vadd.f32 %v547, %v555
    %v558 = vadd.f32 %v548, %v556
    %559 = vrot.lane.b32.xlu0 %v557, 32
    %v560 = vpop.permute.xlu0 %559
    %561 = vrot.lane.b32.xlu0 %v558, 32
    %v562 = vpop.permute.xlu0 %561
    %vm563 = vcmp.lt.s32.totalorder %v220, 32
    %v564 = vsel %vm563, %v560, %v562
    %v565 = vsel %vm563, %v562, %v560
    %v566 = vlaneseq
    %v567 = vshrl.u32 %v566, 7
    %v568 = vsub.s32 1, %v567
    %v569 = vrot.slane %v186, %v568
    %v570 = vlaneseq
    %v571 = vshrl.u32 %v570, 7
    %v572 = vsub.s32 1, %v571
    %v573 = vrot.slane %v187, %v572
    %v574 = vmul.f32 %v569, %v565
    %v575 = vmul.f32 %v573, %v564
    %v576 = vadd.f32 %v489, %v574
    %v577 = vadd.f32 %v490, %v575
    %v578 = vstv %s100
    %v579 = vmul.f32 %v578, %v265
    %v580 = vmul.f32 %v578, %v266
    %v581 = vstv %s149
    %v582 = vmul.f32 %v581, %v267
    %v583 = vmul.f32 %v581, %v268
    %v584 = vadd.f32 %v579, %v582
    %v585 = vadd.f32 %v580, %v583
    %v586 = vstv %s101
    %v587 = vmul.f32 %v586, %v290
    %v588 = vmul.f32 %v586, %v291
    %v589 = vstv %s150
    %v590 = vmul.f32 %v589, %v292
    %v591 = vmul.f32 %v589, %v293
    %v592 = vadd.f32 %v587, %v590
    %v593 = vadd.f32 %v588, %v591
    %v594 = vadd.f32 %v584, %v592
    %v595 = vadd.f32 %v585, %v593
    %v596 = vstv %s102
    %v597 = vmul.f32 %v596, %v315
    %v598 = vmul.f32 %v596, %v316
    %v599 = vstv %s151
    %v600 = vmul.f32 %v599, %v317
    %v601 = vmul.f32 %v599, %v318
    %v602 = vadd.f32 %v597, %v600
    %v603 = vadd.f32 %v598, %v601
    %v604 = vadd.f32 %v594, %v602
    %v605 = vadd.f32 %v595, %v603
    %v606 = vstv %s103
    %v607 = vmul.f32 %v606, %v327
    %v608 = vmul.f32 %v606, %v328
    %v609 = vstv %s152
    %v610 = vmul.f32 %v609, %v329
    %v611 = vmul.f32 %v609, %v330
    %v612 = vadd.f32 %v607, %v610
    %v613 = vadd.f32 %v608, %v611
    %v614 = vadd.f32 %v604, %v612
    %v615 = vadd.f32 %v605, %v613
    %v616 = vstv %s104
    %v617 = vmul.f32 %v616, %v352
    %v618 = vmul.f32 %v616, %v353
    %v619 = vstv %s153
    %v620 = vmul.f32 %v619, %v354
    %v621 = vmul.f32 %v619, %v355
    %v622 = vadd.f32 %v617, %v620
    %v623 = vadd.f32 %v618, %v621
    %v624 = vadd.f32 %v614, %v622
    %v625 = vadd.f32 %v615, %v623
    %v626 = vstv %s105
    %v627 = vmul.f32 %v626, %v377
    %v628 = vmul.f32 %v626, %v378
    %v629 = vstv %s154
    %v630 = vmul.f32 %v629, %v379
    %v631 = vmul.f32 %v629, %v380
    %v632 = vadd.f32 %v627, %v630
    %v633 = vadd.f32 %v628, %v631
    %v634 = vadd.f32 %v624, %v632
    %v635 = vadd.f32 %v625, %v633
    %v636 = vstv %s106
    %v637 = vmul.f32 %v636, %v402
    %v638 = vmul.f32 %v636, %v403
    %v639 = vstv %s155
    %v640 = vmul.f32 %v639, %v404
    %v641 = vmul.f32 %v639, %v405
    %v642 = vadd.f32 %v637, %v640
    %v643 = vadd.f32 %v638, %v641
    %v644 = vadd.f32 %v634, %v642
    %v645 = vadd.f32 %v635, %v643
    %646 = vrot.lane.b32.xlu0 %v644, 16
    %v647 = vpop.permute.xlu0 %646
    %648 = vrot.lane.b32.xlu0 %v645, 16
    %v649 = vpop.permute.xlu0 %648
    %vm650 = vcmp.lt.s32.totalorder %v220, 16
    %v651 = vsel %vm650, %v647, %v649
    %v652 = vsel %vm650, %v649, %v647
    %v653 = vlaneseq
    %v654 = vshrl.u32 %v653, 7
    %v655 = vsub.s32 2, %v654
    %v656 = vrot.slane %v186, %v655
    %v657 = vlaneseq
    %v658 = vshrl.u32 %v657, 7
    %v659 = vsub.s32 2, %v658
    %v660 = vrot.slane %v187, %v659
    %v661 = vmul.f32 %v656, %v652
    %v662 = vmul.f32 %v660, %v651
    %v663 = vadd.f32 %v576, %v661
    %v664 = vadd.f32 %v577, %v662
    %v665 = vstv %s107
    %v666 = vmul.f32 %v665, %v265
    %v667 = vmul.f32 %v665, %v266
    %v668 = vstv %s156
    %v669 = vmul.f32 %v668, %v267
    %v670 = vmul.f32 %v668, %v268
    %v671 = vadd.f32 %v666, %v669
    %v672 = vadd.f32 %v667, %v670
    %v673 = vstv %s108
    %v674 = vmul.f32 %v673, %v290
    %v675 = vmul.f32 %v673, %v291
    %v676 = vstv %s157
    %v677 = vmul.f32 %v676, %v292
    %v678 = vmul.f32 %v676, %v293
    %v679 = vadd.f32 %v674, %v677
    %v680 = vadd.f32 %v675, %v678
    %v681 = vadd.f32 %v671, %v679
    %v682 = vadd.f32 %v672, %v680
    %v683 = vstv %s109
    %v684 = vmul.f32 %v683, %v315
    %v685 = vmul.f32 %v683, %v316
    %v686 = vstv %s158
    %v687 = vmul.f32 %v686, %v317
    %v688 = vmul.f32 %v686, %v318
    %v689 = vadd.f32 %v684, %v687
    %v690 = vadd.f32 %v685, %v688
    %v691 = vadd.f32 %v681, %v689
    %v692 = vadd.f32 %v682, %v690
    %v693 = vstv %s110
    %v694 = vmul.f32 %v693, %v327
    %v695 = vmul.f32 %v693, %v328
    %v696 = vstv %s159
    %v697 = vmul.f32 %v696, %v329
    %v698 = vmul.f32 %v696, %v330
    %v699 = vadd.f32 %v694, %v697
    %v700 = vadd.f32 %v695, %v698
    %v701 = vadd.f32 %v691, %v699
    %v702 = vadd.f32 %v692, %v700
    %v703 = vstv %s111
    %v704 = vmul.f32 %v703, %v352
    %v705 = vmul.f32 %v703, %v353
    %v706 = vstv %s160
    %v707 = vmul.f32 %v706, %v354
    %v708 = vmul.f32 %v706, %v355
    %v709 = vadd.f32 %v704, %v707
    %v710 = vadd.f32 %v705, %v708
    %v711 = vadd.f32 %v701, %v709
    %v712 = vadd.f32 %v702, %v710
    %v713 = vstv %s112
    %v714 = vmul.f32 %v713, %v377
    %v715 = vmul.f32 %v713, %v378
    %v716 = vstv %s161
    %v717 = vmul.f32 %v716, %v379
    %v718 = vmul.f32 %v716, %v380
    %v719 = vadd.f32 %v714, %v717
    %v720 = vadd.f32 %v715, %v718
    %v721 = vadd.f32 %v711, %v719
    %v722 = vadd.f32 %v712, %v720
    %v723 = vstv %s113
    %v724 = vmul.f32 %v723, %v402
    %v725 = vmul.f32 %v723, %v403
    %v726 = vstv %s162
    %v727 = vmul.f32 %v726, %v404
    %v728 = vmul.f32 %v726, %v405
    %v729 = vadd.f32 %v724, %v727
    %v730 = vadd.f32 %v725, %v728
    %v731 = vadd.f32 %v721, %v729
    %v732 = vadd.f32 %v722, %v730
    %v733 = vlaneseq
    %v734 = vshrl.u32 %v733, 7
    %v735 = vsub.s32 3, %v734
    %v736 = vrot.slane %v186, %v735
    %v737 = vlaneseq
    %v738 = vshrl.u32 %v737, 7
    %v739 = vsub.s32 3, %v738
    %v740 = vrot.slane %v187, %v739
    %v741 = vmul.f32 %v736, %v731
    %v742 = vmul.f32 %v740, %v732
    %v743 = vadd.f32 %v663, %v741
    %v744 = vadd.f32 %v664, %v742
    %v745 = vstv %s114
    %v746 = vmul.f32 %v745, %v265
    %v747 = vmul.f32 %v745, %v266
    %v748 = vstv %s163
    %v749 = vmul.f32 %v748, %v267
    %v750 = vmul.f32 %v748, %v268
    %v751 = vadd.f32 %v746, %v749
    %v752 = vadd.f32 %v747, %v750
    %v753 = vstv %s115
    %v754 = vmul.f32 %v753, %v290
    %v755 = vmul.f32 %v753, %v291
    %v756 = vstv %s164
    %v757 = vmul.f32 %v756, %v292
    %v758 = vmul.f32 %v756, %v293
    %v759 = vadd.f32 %v754, %v757
    %v760 = vadd.f32 %v755, %v758
    %v761 = vadd.f32 %v751, %v759
    %v762 = vadd.f32 %v752, %v760
    %v763 = vstv %s116
    %v764 = vmul.f32 %v763, %v315
    %v765 = vmul.f32 %v763, %v316
    %v766 = vstv %s165
    %v767 = vmul.f32 %v766, %v317
    %v768 = vmul.f32 %v766, %v318
    %v769 = vadd.f32 %v764, %v767
    %v770 = vadd.f32 %v765, %v768
    %v771 = vadd.f32 %v761, %v769
    %v772 = vadd.f32 %v762, %v770
    %v773 = vstv %s117
    %v774 = vmul.f32 %v773, %v327
    %v775 = vmul.f32 %v773, %v328
    %v776 = vstv %s166
    %v777 = vmul.f32 %v776, %v329
    %v778 = vmul.f32 %v776, %v330
    %v779 = vadd.f32 %v774, %v777
    %v780 = vadd.f32 %v775, %v778
    %v781 = vadd.f32 %v771, %v779
    %v782 = vadd.f32 %v772, %v780
    %v783 = vstv %s118
    %v784 = vmul.f32 %v783, %v352
    %v785 = vmul.f32 %v783, %v353
    %v786 = vstv %s167
    %v787 = vmul.f32 %v786, %v354
    %v788 = vmul.f32 %v786, %v355
    %v789 = vadd.f32 %v784, %v787
    %v790 = vadd.f32 %v785, %v788
    %v791 = vadd.f32 %v781, %v789
    %v792 = vadd.f32 %v782, %v790
    %v793 = vstv %s119
    %v794 = vmul.f32 %v793, %v377
    %v795 = vmul.f32 %v793, %v378
    %v796 = vstv %s168
    %v797 = vmul.f32 %v796, %v379
    %v798 = vmul.f32 %v796, %v380
    %v799 = vadd.f32 %v794, %v797
    %v800 = vadd.f32 %v795, %v798
    %v801 = vadd.f32 %v791, %v799
    %v802 = vadd.f32 %v792, %v800
    %v803 = vstv %s120
    %v804 = vmul.f32 %v803, %v402
    %v805 = vmul.f32 %v803, %v403
    %v806 = vstv %s169
    %v807 = vmul.f32 %v806, %v404
    %v808 = vmul.f32 %v806, %v405
    %v809 = vadd.f32 %v804, %v807
    %v810 = vadd.f32 %v805, %v808
    %v811 = vadd.f32 %v801, %v809
    %v812 = vadd.f32 %v802, %v810
    %813 = vrot.lane.b32.xlu0 %v811, 112
    %v814 = vpop.permute.xlu0 %813
    %815 = vrot.lane.b32.xlu0 %v812, 112
    %v816 = vpop.permute.xlu0 %815
    %vm817 = vcmp.lt.s32.totalorder %v220, 112
    %v818 = vsel %vm817, %v814, %v816
    %v819 = vsel %vm817, %v816, %v814
    %v820 = vlaneseq
    %v821 = vshrl.u32 %v820, 7
    %v822 = vsub.s32 4, %v821
    %v823 = vrot.slane %v186, %v822
    %v824 = vlaneseq
    %v825 = vshrl.u32 %v824, 7
    %v826 = vsub.s32 4, %v825
    %v827 = vrot.slane %v187, %v826
    %v828 = vmul.f32 %v823, %v818
    %v829 = vmul.f32 %v827, %v819
    %v830 = vadd.f32 %v743, %v828
    %v831 = vadd.f32 %v744, %v829
    %v832 = vstv %s121
    %v833 = vmul.f32 %v832, %v265
    %v834 = vmul.f32 %v832, %v266
    %v835 = vstv %s170
    %v836 = vmul.f32 %v835, %v267
    %v837 = vmul.f32 %v835, %v268
    %v838 = vadd.f32 %v833, %v836
    %v839 = vadd.f32 %v834, %v837
    %v840 = vstv %s122
    %v841 = vmul.f32 %v840, %v290
    %v842 = vmul.f32 %v840, %v291
    %v843 = vstv %s171
    %v844 = vmul.f32 %v843, %v292
    %v845 = vmul.f32 %v843, %v293
    %v846 = vadd.f32 %v841, %v844
    %v847 = vadd.f32 %v842, %v845
    %v848 = vadd.f32 %v838, %v846
    %v849 = vadd.f32 %v839, %v847
    %v850 = vstv %s123
    %v851 = vmul.f32 %v850, %v315
    %v852 = vmul.f32 %v850, %v316
    %v853 = vstv %s172
    %v854 = vmul.f32 %v853, %v317
    %v855 = vmul.f32 %v853, %v318
    %v856 = vadd.f32 %v851, %v854
    %v857 = vadd.f32 %v852, %v855
    %v858 = vadd.f32 %v848, %v856
    %v859 = vadd.f32 %v849, %v857
    %v860 = vstv %s124
    %v861 = vmul.f32 %v860, %v327
    %v862 = vmul.f32 %v860, %v328
    %v863 = vstv %s173
    %v864 = vmul.f32 %v863, %v329
    %v865 = vmul.f32 %v863, %v330
    %v866 = vadd.f32 %v861, %v864
    %v867 = vadd.f32 %v862, %v865
    %v868 = vadd.f32 %v858, %v866
    %v869 = vadd.f32 %v859, %v867
    %v870 = vstv %s125
    %v871 = vmul.f32 %v870, %v352
    %v872 = vmul.f32 %v870, %v353
    %v873 = vstv %s174
    %v874 = vmul.f32 %v873, %v354
    %v875 = vmul.f32 %v873, %v355
    %v876 = vadd.f32 %v871, %v874
    %v877 = vadd.f32 %v872, %v875
    %v878 = vadd.f32 %v868, %v876
    %v879 = vadd.f32 %v869, %v877
    %v880 = vstv %s126
    %v881 = vmul.f32 %v880, %v377
    %v882 = vmul.f32 %v880, %v378
    %v883 = vstv %s175
    %v884 = vmul.f32 %v883, %v379
    %v885 = vmul.f32 %v883, %v380
    %v886 = vadd.f32 %v881, %v884
    %v887 = vadd.f32 %v882, %v885
    %v888 = vadd.f32 %v878, %v886
    %v889 = vadd.f32 %v879, %v887
    %v890 = vstv %s127
    %v891 = vmul.f32 %v890, %v402
    %v892 = vmul.f32 %v890, %v403
    %v893 = vstv %s176
    %v894 = vmul.f32 %v893, %v404
    %v895 = vmul.f32 %v893, %v405
    %v896 = vadd.f32 %v891, %v894
    %v897 = vadd.f32 %v892, %v895
    %v898 = vadd.f32 %v888, %v896
    %v899 = vadd.f32 %v889, %v897
    %900 = vrot.lane.b32.xlu0 %v898, 96
    %v901 = vpop.permute.xlu0 %900
    %902 = vrot.lane.b32.xlu0 %v899, 96
    %v903 = vpop.permute.xlu0 %902
    %vm904 = vcmp.lt.s32.totalorder %v220, 96
    %v905 = vsel %vm904, %v901, %v903
    %v906 = vsel %vm904, %v903, %v901
    %v907 = vlaneseq
    %v908 = vshrl.u32 %v907, 7
    %v909 = vsub.s32 5, %v908
    %v910 = vrot.slane %v186, %v909
    %v911 = vlaneseq
    %v912 = vshrl.u32 %v911, 7
    %v913 = vsub.s32 5, %v912
    %v914 = vrot.slane %v187, %v913
    %v915 = vmul.f32 %v910, %v905
    %v916 = vmul.f32 %v914, %v906
    %v917 = vadd.f32 %v830, %v915
    %v918 = vadd.f32 %v831, %v916
    %v919 = vstv %s128
    %v920 = vmul.f32 %v919, %v265
    %v921 = vmul.f32 %v919, %v266
    %v922 = vstv %s177
    %v923 = vmul.f32 %v922, %v267
    %v924 = vmul.f32 %v922, %v268
    %v925 = vadd.f32 %v920, %v923
    %v926 = vadd.f32 %v921, %v924
    %v927 = vstv %s129
    %v928 = vmul.f32 %v927, %v290
    %v929 = vmul.f32 %v927, %v291
    %v930 = vstv %s178
    %v931 = vmul.f32 %v930, %v292
    %v932 = vmul.f32 %v930, %v293
    %v933 = vadd.f32 %v928, %v931
    %v934 = vadd.f32 %v929, %v932
    %v935 = vadd.f32 %v925, %v933
    %v936 = vadd.f32 %v926, %v934
    %v937 = vstv %s130
    %v938 = vmul.f32 %v937, %v315
    %v939 = vmul.f32 %v937, %v316
    %v940 = vstv %s179
    %v941 = vmul.f32 %v940, %v317
    %v942 = vmul.f32 %v940, %v318
    %v943 = vadd.f32 %v938, %v941
    %v944 = vadd.f32 %v939, %v942
    %v945 = vadd.f32 %v935, %v943
    %v946 = vadd.f32 %v936, %v944
    %v947 = vstv %s131
    %v948 = vmul.f32 %v947, %v327
    %v949 = vmul.f32 %v947, %v328
    %v950 = vstv %s180
    %v951 = vmul.f32 %v950, %v329
    %v952 = vmul.f32 %v950, %v330
    %v953 = vadd.f32 %v948, %v951
    %v954 = vadd.f32 %v949, %v952
    %v955 = vadd.f32 %v945, %v953
    %v956 = vadd.f32 %v946, %v954
    %v957 = vstv %s132
    %v958 = vmul.f32 %v957, %v352
    %v959 = vmul.f32 %v957, %v353
    %v960 = vstv %s181
    %v961 = vmul.f32 %v960, %v354
    %v962 = vmul.f32 %v960, %v355
    %v963 = vadd.f32 %v958, %v961
    %v964 = vadd.f32 %v959, %v962
    %v965 = vadd.f32 %v955, %v963
    %v966 = vadd.f32 %v956, %v964
    %v967 = vstv %s133
    %v968 = vmul.f32 %v967, %v377
    %v969 = vmul.f32 %v967, %v378
    %v970 = vstv %s182
    %v971 = vmul.f32 %v970, %v379
    %v972 = vmul.f32 %v970, %v380
    %v973 = vadd.f32 %v968, %v971
    %v974 = vadd.f32 %v969, %v972
    %v975 = vadd.f32 %v965, %v973
    %v976 = vadd.f32 %v966, %v974
    %v977 = vstv %s134
    %v978 = vmul.f32 %v977, %v402
    %v979 = vmul.f32 %v977, %v403
    %v980 = vstv %s183
    %v981 = vmul.f32 %v980, %v404
    %v982 = vmul.f32 %v980, %v405
    %v983 = vadd.f32 %v978, %v981
    %v984 = vadd.f32 %v979, %v982
    %v985 = vadd.f32 %v975, %v983
    %v986 = vadd.f32 %v976, %v984
    %987 = vrot.lane.b32.xlu0 %v985, 80
    %v988 = vpop.permute.xlu0 %987
    %989 = vrot.lane.b32.xlu0 %v986, 80
    %v990 = vpop.permute.xlu0 %989
    %vm991 = vcmp.lt.s32.totalorder %v220, 80
    %v992 = vsel %vm991, %v988, %v990
    %v993 = vsel %vm991, %v990, %v988
    %v994 = vlaneseq
    %v995 = vshrl.u32 %v994, 7
    %v996 = vsub.s32 6, %v995
    %v997 = vrot.slane %v186, %v996
    %v998 = vlaneseq
    %v999 = vshrl.u32 %v998, 7
    %v1000 = vsub.s32 6, %v999
    %v1001 = vrot.slane %v187, %v1000
    %v1002 = vmul.f32 %v997, %v992
    %v1003 = vmul.f32 %v1001, %v993
    %v1004 = vadd.f32 %v917, %v1002
    %v1005 = vadd.f32 %v918, %v1003
    %v1006 = vxor.u32 %v1004, 2147483648
    %v1007 = vxor.u32 %v1005, 2147483648
    %v1008 = vmul.f32 %v1006, 1.442695
    %v1009 = vpow.pop %v1008
    %v1010 = vmul.f32 %v1007, 1.442695
    %v1011 = vpow.pop %v1010
    %v1012 = vadd.f32 %v1009, 1.0
    %v1013 = vadd.f32 %v1011, 1.0
    %v1014 = vrcp.pop %v1012
    %v1015 = vmul.f32 1.0, %v1014
    %v1016 = vrcp.pop %v1013
    %v1017 = vmul.f32 1.0, %v1016
    %v1020 = vcombine.low %v1015, %v1017
    %v1022 = vunpack.c.l.s4 1983009808
    %v1023 = vunpack.c.0.s8 %v1022
    %v1024 = vlaneseq
    %v1025 = vshrl.u32 %v1024, 7
    %v1026 = vsub.s32 %v1023, %v1025
    %v1027 = vrot.slane %v1020, %v1026
    %1029 = vst [vmem:[#allocation10] sm:$0xf] %v1027
    // Predicated region
    $region26: #{tpu_custom_call.1} parent=1 // pred_check
      _
    $region27: #{tpu_custom_call.1} parent=1 // pred_check_branch
      %1031 = sbr.rel (0) target = $region29
    $region28: #{tpu_custom_call.1} parent=1 // pred_region
      %s1033 = ssub.s32 64, 64
      %1034 = vsyncadd [#allocation6], %s1033
      %s1036 = sshll.u32 [#allocation10], 4
      %s1037 = int_to_ptr.vmem [resolvable:$true] %s1036
      %1039 = dma.vmem_to_hbm [thread:$0]  %s1037, 64, %s4, [#allocation6]
    $region29: #{tpu_custom_call.1} parent=1 // pred_fallthru
      _
    // Predicated region
    $region30: #{tpu_custom_call.1} parent=1 // pred_check
      _
    $region31: #{tpu_custom_call.1} parent=1 // pred_check_branch
      %1041 = sbr.rel (0) target = $region33
    $region32: #{tpu_custom_call.1} parent=1 // pred_region
      %1042 = dma.done [#allocation6], 64
    $region33: #{tpu_custom_call.1} parent=1 // pred_fallthru
      _
    %1043 = vsyncpa [#allocation5], 1
    %1044 = vsyncpa [#allocation8], 1
    %1045 = vsyncpa [#allocation6], 1

</llo_original>
